<compile_context>
chip_gen: v5e
topology: v5e:2x2
jax: 0.10.0
libtpu: 0.0.40
codegen_flags: <defaults>
</compile_context>

<pallas_src>
import functools

import jax
import jax.numpy as jnp
from jax.experimental import pallas as pl
from jax.experimental.pallas import tpu as pltpu


# ----------------------------------------------------------------------------
# Kernel: one (batch element, query tile) per grid step.
# ----------------------------------------------------------------------------
def _encoder_layer_kernel(
    x_ref, q_ref, k_ref, v_ref, bias_ref,
    wo_ref, bo_ref,
    g2_ref, be2_ref,
    w1_ref, b1_ref, w2_ref, b2_ref,
    o_ref,
    oh_sc,
    *, num_heads, eps,
):
    D = x_ref.shape[2]
    dh = D // num_heads
    cd = oh_sc.dtype                       # MXU compute dtype (f32 or bf16)

    x_t = x_ref[0].astype(jnp.float32)     # [tq, D] residual input
    q_t = q_ref[0]                         # [tq, D] (cd), 1/sqrt(dh) folded in
    k_t = k_ref[0]                         # [S,  D] (cd)
    v_t = v_ref[0]                         # [S,  D] (cd)
    bias = bias_ref[0]                     # [1,  S] additive key-padding bias

    # q @ k^T without an explicit transpose: contract last dims of both operands.
    trans_b_dims = (((1,), (1,)), ((), ()))

    # Per-head attention; each head output is written lane-contiguously into
    # oh_sc so the output projection is a single dense [tq,D]x[D,D] MXU matmul.
    for h in range(num_heads):             # static loop (small H in this config)
        lo, hi = h * dh, (h + 1) * dh
        s = jax.lax.dot_general(q_t[:, lo:hi], k_t[:, lo:hi], trans_b_dims,
                                preferred_element_type=jnp.float32)   # [tq, S]
        s = s + bias
        s = s - jnp.max(s, axis=-1, keepdims=True)
        p = jnp.exp(s)                                                # unnormalized
        inv_l = pl.reciprocal(jnp.sum(p, axis=-1, keepdims=True), approx=True)
        o_h = jnp.dot(p.astype(cd), v_t[:, lo:hi],
                      preferred_element_type=jnp.float32)             # [tq, dh]
        oh_sc[:, lo:hi] = (o_h * inv_l).astype(cd)

    attn = jnp.dot(oh_sc[...], wo_ref[...],
                   preferred_element_type=jnp.float32) + bo_ref[0]    # [tq, D]
    x1 = x_t + attn                        # residual (dropout = identity)

    # --- pre-norm feed-forward sublayer -------------------------------------
    mu = jnp.mean(x1, axis=-1, keepdims=True)
    var = jnp.mean((x1 - mu) ** 2, axis=-1, keepdims=True)
    xn2 = (x1 - mu) * jax.lax.rsqrt(var + eps) * g2_ref[0] + be2_ref[0]
    h1 = jnp.dot(xn2.astype(cd), w1_ref[...],
                 preferred_element_type=jnp.float32) + b1_ref[0]
    h1 = jnp.maximum(h1, 0.0)
    ff = jnp.dot(h1.astype(cd), w2_ref[...],
                 preferred_element_type=jnp.float32) + b2_ref[0]

    o_ref[0] = (x1 + ff).astype(o_ref.dtype)


# ----------------------------------------------------------------------------
# Host-side helpers
# ----------------------------------------------------------------------------
def _tpu_vmem_capacity_bytes():
    try:
        return int(pltpu.get_tpu_info().vmem_capacity_bytes)
    except Exception:
        return 128 * 1024 * 1024


def _pick_q_tile(S, vmem_cap, requested=None):
    if requested is not None and S % requested == 0:
        return requested
    # v7x-class (64 MiB VMEM/TC): prefer 128; v5e/v6e (128 MiB): prefer 256/512.
    prefs = (128, 256, 512) if vmem_cap <= (64 << 20) else (256, 512, 128)
    for t in prefs:
        if S % t == 0:
            return t
    # TODO(synk): pad ragged S up to a multiple of 128 instead of a single tile.
    return S


def encoder_layer(x, mask, params, *, num_heads, eps=1e-6, q_tile=None,
                  compute_dtype=jnp.float32, single_buffer_weights=True):
    B, S, D = x.shape
    F = params["w1"].shape[1]
    dh = D // num_heads
    f32 = jnp.float32

    vmem_cap = _tpu_vmem_capacity_bytes()
    tq = _pick_q_tile(S, vmem_cap, q_tile)
    num_q = S // tq

    # ---- host side (plain XLA): LayerNorm1 + Q/K/V projection --------------
    xf = x.astype(f32)
    mu = jnp.mean(xf, axis=-1, keepdims=True)
    var = jnp.mean((xf - mu) ** 2, axis=-1, keepdims=True)
    xn = (xf - mu) * jax.lax.rsqrt(var + eps) * params["g1"].astype(f32) \
         + params["be1"].astype(f32)
    scale = 1.0 / jnp.sqrt(f32(dh))
    q = ((xn @ params["wq"].astype(f32) + params["bq"].astype(f32)) * scale
         ).astype(compute_dtype)
    k = (xn @ params["wk"].astype(f32) + params["bk"].astype(f32)
         ).astype(compute_dtype)
    v = (xn @ params["wv"].astype(f32) + params["bv"].astype(f32)
         ).astype(compute_dtype)

    # additive key-padding bias precomputed on the host ([B, 1, S], f32)
    bias = jnp.where(mask.astype(f32) == 0.0, f32(-1e9), f32(0.0))

    wo = params["wo"].astype(compute_dtype)
    w1 = params["w1"].astype(compute_dtype)
    w2 = params["w2"].astype(compute_dtype)
    bo = params["bo"].astype(f32)
    b1 = params["b1"].astype(f32)
    b2 = params["b2"].astype(f32)
    g2 = params["g2"].astype(f32)
    be2 = params["be2"].astype(f32)

    # ---- VMEM budget (derived from actual block residency, with headroom) ---
    cdt = jnp.dtype(compute_dtype).itemsize
    xdt = jnp.dtype(x.dtype).itemsize
    n_wbuf = 1 if single_buffer_weights else 2
    resident = (
        n_wbuf * (D * D + 2 * D * F) * cdt          # Wo, W1, W2
        + n_wbuf * (4 * D + F) * 4                  # f32 biases + ln2 params
        + 2 * 2 * S * D * cdt                       # K, V blocks (double buffered)
        + 2 * tq * D * (2 * xdt + cdt)              # x, q, out tiles (double buffered)
        + 2 * S * 4                                 # bias block
        + tq * D * cdt                              # per-step head-output scratch
        + tq * S * 4 + tq * F * 4                   # live working set (scores, FFN)
    )
    headroom = 8 << 20
    vmem_limit = int(max(32 << 20,
                         min(vmem_cap - headroom,
                             int(1.5 * resident) + (8 << 20))))

    # ---- advisory cost estimate for XLA's scheduler --------------------------
    cost = pl.CostEstimate(
        flops=int(2 * B * S * (D * D + 2 * D * F) + 4 * B * S * S * D),
        transcendentals=int(B * num_heads * S * S),
        bytes_accessed=int(B * S * D * (2 * xdt + 3 * cdt) + B * S * 4
                           + (D * D + 2 * D * F) * cdt + (4 * D + F) * 4),
    )

    def const_spec(shape):
        # Constant-index blocks: single-buffered (second buffer would be dead VMEM).
        if single_buffer_weights:
            return pl.BlockSpec(shape, lambda b, qi: (0, 0),
                                pipeline_mode=pl.Buffered(1))
        return pl.BlockSpec(shape, lambda b, qi: (0, 0))

    in_specs = [
        pl.BlockSpec((1, tq, D), lambda b, qi: (b, qi, 0)),   # x tile (residual)
        pl.BlockSpec((1, tq, D), lambda b, qi: (b, qi, 0)),   # q tile (scaled)
        pl.BlockSpec((1, S, D), lambda b, qi: (b, 0, 0)),     # k (full seq per b)
        pl.BlockSpec((1, S, D), lambda b, qi: (b, 0, 0)),     # v (full seq per b)
        pl.BlockSpec((1, 1, S), lambda b, qi: (b, 0, 0)),     # additive mask bias
        const_spec((D, D)), const_spec((1, D)),               # Wo, bo
        const_spec((1, D)), const_spec((1, D)),               # ln2 gamma/beta
        const_spec((D, F)), const_spec((1, F)),               # W1, b1
        const_spec((F, D)), const_spec((1, D)),               # W2, b2
    ]

    kernel = functools.partial(_encoder_layer_kernel,
                               num_heads=num_heads, eps=eps)

    return pl.pallas_call(
        kernel,
        out_shape=jax.ShapeDtypeStruct((B, S, D), x.dtype),
        grid_spec=pltpu.PrefetchScalarGridSpec(
            num_scalar_prefetch=0,
            grid=(B, num_q),
            in_specs=in_specs,
            out_specs=pl.BlockSpec((1, tq, D), lambda b, qi: (b, qi, 0)),
            scratch_shapes=[pltpu.VMEM((tq, D), compute_dtype)],   # head outputs
        ),
        compiler_params=pltpu.CompilerParams(
            dimension_semantics=("parallel", "parallel"),
            vmem_limit_bytes=vmem_limit,
        ),
        cost_estimate=cost,
    )(x, q, k, v, bias, wo, bo, g2, be2, w1, b1, w2, b2)


# ----------------------------------------------------------------------------
# Pure-JAX reference mirroring the PyTorch forward (dropout in eval mode)
# ----------------------------------------------------------------------------
def encoder_layer_reference(x, mask, params, *, num_heads, eps=1e-6):
    B, S, D = x.shape
    dh = D // num_heads

    def ln(v, g, b):
        mu = jnp.mean(v, -1, keepdims=True)
        var = jnp.mean((v - mu) ** 2, -1, keepdims=True)
        return (v - mu) * jax.lax.rsqrt(var + eps) * g + b

    xn = ln(x, params["g1"][0], params["be1"][0])
    q = xn @ params["wq"] + params["bq"][0]
    k = xn @ params["wk"] + params["bk"][0]
    v = xn @ params["wv"] + params["bv"][0]
    q = q.reshape(B, S, num_heads, dh).transpose(0, 2, 1, 3)
    k = k.reshape(B, S, num_heads, dh).transpose(0, 2, 1, 3)
    v = v.reshape(B, S, num_heads, dh).transpose(0, 2, 1, 3)
    s = jnp.einsum("bhqd,bhkd->bhqk", q, k) / jnp.sqrt(jnp.float32(dh))
    m = mask[:, None, :, :]                       # [B,1,1,S]
    s = jnp.where(m == 0.0, -1e9, s)
    p = jax.nn.softmax(s, axis=-1)
    o = jnp.einsum("bhqk,bhkd->bhqd", p, v).transpose(0, 2, 1, 3).reshape(B, S, D)
    x1 = x + (o @ params["wo"] + params["bo"][0])

    xn2 = ln(x1, params["g2"][0], params["be2"][0])
    ff = jax.nn.relu(xn2 @ params["w1"] + params["b1"][0]) @ params["w2"] + params["b2"][0]
    return x1 + ff


if __name__ == "__main__":
    B, S, D, H, F = 2, 8, 32, 4, 64

    key = jax.random.PRNGKey(0)
    keys = jax.random.split(key, 10)

    def init(k, shape, scale=0.05):
        return (scale * jax.random.normal(k, shape)).astype(jnp.float32)

    params = {
        "g1": jnp.ones((1, D), jnp.float32),
        "be1": jnp.zeros((1, D), jnp.float32),
        "wq": init(keys[0], (D, D)), "bq": jnp.zeros((1, D), jnp.float32),
        "wk": init(keys[1], (D, D)), "bk": jnp.zeros((1, D), jnp.float32),
        "wv": init(keys[2], (D, D)), "bv": jnp.zeros((1, D), jnp.float32),
        "wo": init(keys[3], (D, D)), "bo": jnp.zeros((1, D), jnp.float32),
        "g2": jnp.ones((1, D), jnp.float32),
        "be2": jnp.zeros((1, D), jnp.float32),
        "w1": init(keys[4], (D, F)), "b1": jnp.zeros((1, F), jnp.float32),
        "w2": init(keys[5], (F, D)), "b2": jnp.zeros((1, D), jnp.float32),
    }

    x = jax.random.normal(keys[6], (B, S, D), dtype=jnp.float32)
    # key-padding mask: batch 0 full length, batch 1 has last 2 positions masked
    lengths = jnp.array([S, S - 2])
    mask = (jnp.arange(S)[None, :] < lengths[:, None]).astype(jnp.float32)[:, None, :]  # [B,1,S]

    ref = encoder_layer_reference(x, mask, params, num_heads=H)

    def run_layer(**kw):
        # Single-buffered constant blocks are the default; fall back to regular
        # double buffering if this jax version rejects pipeline_mode=Buffered(1).
        try:
            out = encoder_layer(x, mask, params, num_heads=H, **kw)
            return jax.block_until_ready(out)
        except Exception:
            out = encoder_layer(x, mask, params, num_heads=H,
                                single_buffer_weights=False, **kw)
            return jax.block_until_ready(out)

    # f32 MXU path (exact up to approx-reciprocal / summation-order differences)
    out = run_layer()
    assert out.shape == (B, S, D)
    assert jnp.allclose(out, ref, atol=2e-3, rtol=2e-3), "f32 mismatch vs reference"

    # bf16 MXU path (production config for v5e/v6e/v7x): bf16 matmul operands,
    # f32 accumulation and f32 layernorm/softmax/residual math.
    out_bf16 = run_layer(compute_dtype=jnp.bfloat16)
    assert jnp.allclose(out_bf16, ref, atol=5e-2, rtol=5e-2), "bf16 mismatch vs reference"

    print("KERNEL_OK")
</pallas_src>

<mosaic_0001>
module attributes {stable_mosaic.version = 11 : i64} {
  func.func @_encoder_layer_kernel(%arg0: i32, %arg1: i32, %arg2: memref<1x8x32xf32, #tpu.memory_space<vmem>>, %arg3: memref<1x8x32xf32, #tpu.memory_space<vmem>>, %arg4: memref<1x8x32xf32, #tpu.memory_space<vmem>>, %arg5: memref<1x8x32xf32, #tpu.memory_space<vmem>>, %arg6: memref<1x1x8xf32, #tpu.memory_space<vmem>>, %arg7: memref<32x32xf32, #tpu.memory_space<vmem>>, %arg8: memref<1x32xf32, #tpu.memory_space<vmem>>, %arg9: memref<1x32xf32, #tpu.memory_space<vmem>>, %arg10: memref<1x32xf32, #tpu.memory_space<vmem>>, %arg11: memref<32x64xf32, #tpu.memory_space<vmem>>, %arg12: memref<1x64xf32, #tpu.memory_space<vmem>>, %arg13: memref<64x32xf32, #tpu.memory_space<vmem>>, %arg14: memref<1x32xf32, #tpu.memory_space<vmem>>, %arg15: memref<1x8x32xf32, #tpu.memory_space<vmem>>, %arg16: memref<8x32xf32, #tpu.memory_space<vmem>>) attributes {dimension_semantics = [#tpu.dimension_semantics<parallel>, #tpu.dimension_semantics<parallel>], iteration_bounds = array<i64: 2, 1>, scalar_prefetch = 0 : i64, scratch_operands = 1 : i64, tpu.core_type = #tpu.core_type<tc>, window_params = [{transform_indices = @transform_0, window_bounds = array<i64: 1, 8, 32>}, {transform_indices = @transform_1, window_bounds = array<i64: 1, 8, 32>}, {transform_indices = @transform_2, window_bounds = array<i64: 1, 8, 32>}, {transform_indices = @transform_3, window_bounds = array<i64: 1, 8, 32>}, {transform_indices = @transform_4, window_bounds = array<i64: 1, 1, 8>}, {pipeline_mode = #tpu.pipeline_mode<synchronous>, transform_indices = @transform_5, window_bounds = array<i64: 32, 32>}, {pipeline_mode = #tpu.pipeline_mode<synchronous>, transform_indices = @transform_6, window_bounds = array<i64: 1, 32>}, {pipeline_mode = #tpu.pipeline_mode<synchronous>, transform_indices = @transform_7, window_bounds = array<i64: 1, 32>}, {pipeline_mode = #tpu.pipeline_mode<synchronous>, transform_indices = @transform_8, window_bounds = array<i64: 1, 32>}, {pipeline_mode = #tpu.pipeline_mode<synchronous>, transform_indices = @transform_9, window_bounds = array<i64: 32, 64>}, {pipeline_mode = #tpu.pipeline_mode<synchronous>, transform_indices = @transform_10, window_bounds = array<i64: 1, 64>}, {pipeline_mode = #tpu.pipeline_mode<synchronous>, transform_indices = @transform_11, window_bounds = array<i64: 64, 32>}, {pipeline_mode = #tpu.pipeline_mode<synchronous>, transform_indices = @transform_12, window_bounds = array<i64: 1, 32>}, {transform_indices = @transform_13, window_bounds = array<i64: 1, 8, 32>}]} {
    %c0 = arith.constant 0 : index
    %c0_0 = arith.constant 0 : index
    %c0_1 = arith.constant 0 : index
    %0 = vector.load %arg2[%c0, %c0_0, %c0_1] : memref<1x8x32xf32, #tpu.memory_space<vmem>>, vector<1x8x32xf32>
    %1 = vector.shape_cast %0 : vector<1x8x32xf32> to vector<8x32xf32>
    %c0_2 = arith.constant 0 : index
    %c0_3 = arith.constant 0 : index
    %c0_4 = arith.constant 0 : index
    %2 = vector.load %arg3[%c0_2, %c0_3, %c0_4] : memref<1x8x32xf32, #tpu.memory_space<vmem>>, vector<1x8x32xf32>
    %3 = vector.shape_cast %2 : vector<1x8x32xf32> to vector<8x32xf32>
    %c0_5 = arith.constant 0 : index
    %c0_6 = arith.constant 0 : index
    %c0_7 = arith.constant 0 : index
    %4 = vector.load %arg4[%c0_5, %c0_6, %c0_7] : memref<1x8x32xf32, #tpu.memory_space<vmem>>, vector<1x8x32xf32>
    %5 = vector.shape_cast %4 : vector<1x8x32xf32> to vector<8x32xf32>
    %c0_8 = arith.constant 0 : index
    %c0_9 = arith.constant 0 : index
    %c0_10 = arith.constant 0 : index
    %6 = vector.load %arg5[%c0_8, %c0_9, %c0_10] : memref<1x8x32xf32, #tpu.memory_space<vmem>>, vector<1x8x32xf32>
    %7 = vector.shape_cast %6 : vector<1x8x32xf32> to vector<8x32xf32>
    %c0_11 = arith.constant 0 : index
    %c0_12 = arith.constant 0 : index
    %c0_13 = arith.constant 0 : index
    %8 = vector.load %arg6[%c0_11, %c0_12, %c0_13] : memref<1x1x8xf32, #tpu.memory_space<vmem>>, vector<1x1x8xf32>
    %9 = vector.shape_cast %8 : vector<1x1x8xf32> to vector<1x8xf32>
    %10 = vector.extract_strided_slice %3 {offsets = [0, 0], sizes = [8, 8], strides = [1, 1]} : vector<8x32xf32> to vector<8x8xf32>
    %11 = vector.extract_strided_slice %5 {offsets = [0, 0], sizes = [8, 8], strides = [1, 1]} : vector<8x32xf32> to vector<8x8xf32>
    %cst = arith.constant dense<0.000000e+00> : vector<8x8xf32>
    %12 = tpu.matmul %10, %11, %cst {dimension_numbers = #tpu.dot_dimension_numbers<[1], [1], [0], [0], [0, 0, 1, 0], [], []>} : vector<8x8xf32>, vector<8x8xf32>, vector<8x8xf32> -> vector<8x8xf32>
    %13 = vector.broadcast %9 : vector<1x8xf32> to vector<8x8xf32>
    %14 = arith.addf %12, %13 : vector<8x8xf32>
    %cst_14 = arith.constant dense<0xFF800000> : vector<8xf32>
    %15 = vector.multi_reduction <maximumf>, %14, %cst_14 [1] : vector<8x8xf32> to vector<8xf32>
    %16 = vector.shape_cast %15 : vector<8xf32> to vector<8x1xf32>
    %17 = vector.broadcast %16 : vector<8x1xf32> to vector<8x8xf32>
    %18 = arith.subf %14, %17 : vector<8x8xf32>
    %19 = math.exp %18 : vector<8x8xf32>
    %cst_15 = arith.constant dense<0.000000e+00> : vector<8xf32>
    %20 = vector.multi_reduction <add>, %19, %cst_15 [1] : vector<8x8xf32> to vector<8xf32>
    %21 = vector.shape_cast %20 : vector<8xf32> to vector<8x1xf32>
    %22 = tpu.reciprocal %21 {approx = true} : vector<8x1xf32> -> vector<8x1xf32>
    %23 = vector.extract_strided_slice %7 {offsets = [0, 0], sizes = [8, 8], strides = [1, 1]} : vector<8x32xf32> to vector<8x8xf32>
    %cst_16 = arith.constant dense<0.000000e+00> : vector<8x8xf32>
    %24 = tpu.matmul %19, %23, %cst_16 {dimension_numbers = #tpu.dot_dimension_numbers<[1], [0], [0], [1], [0, 0, 1, 1], [], []>} : vector<8x8xf32>, vector<8x8xf32>, vector<8x8xf32> -> vector<8x8xf32>
    %25 = vector.broadcast %22 : vector<8x1xf32> to vector<8x8xf32>
    %26 = arith.mulf %24, %25 : vector<8x8xf32>
    %c0_17 = arith.constant 0 : index
    %c0_18 = arith.constant 0 : index
    %27 = vector.load %arg16[%c0_17, %c0_18] : memref<8x32xf32, #tpu.memory_space<vmem>>, vector<8x8xf32>
    tpu.vector_store %arg16[%c0_17, %c0_18], %26 {strides = array<i32>} : memref<8x32xf32, #tpu.memory_space<vmem>>, vector<8x8xf32>,
    %28 = vector.extract_strided_slice %3 {offsets = [0, 8], sizes = [8, 8], strides = [1, 1]} : vector<8x32xf32> to vector<8x8xf32>
    %29 = vector.extract_strided_slice %5 {offsets = [0, 8], sizes = [8, 8], strides = [1, 1]} : vector<8x32xf32> to vector<8x8xf32>
    %cst_19 = arith.constant dense<0.000000e+00> : vector<8x8xf32>
    %30 = tpu.matmul %28, %29, %cst_19 {dimension_numbers = #tpu.dot_dimension_numbers<[1], [1], [0], [0], [0, 0, 1, 0], [], []>} : vector<8x8xf32>, vector<8x8xf32>, vector<8x8xf32> -> vector<8x8xf32>
    %31 = vector.broadcast %9 : vector<1x8xf32> to vector<8x8xf32>
    %32 = arith.addf %30, %31 : vector<8x8xf32>
    %cst_20 = arith.constant dense<0xFF800000> : vector<8xf32>
    %33 = vector.multi_reduction <maximumf>, %32, %cst_20 [1] : vector<8x8xf32> to vector<8xf32>
    %34 = vector.shape_cast %33 : vector<8xf32> to vector<8x1xf32>
    %35 = vector.broadcast %34 : vector<8x1xf32> to vector<8x8xf32>
    %36 = arith.subf %32, %35 : vector<8x8xf32>
    %37 = math.exp %36 : vector<8x8xf32>
    %cst_21 = arith.constant dense<0.000000e+00> : vector<8xf32>
    %38 = vector.multi_reduction <add>, %37, %cst_21 [1] : vector<8x8xf32> to vector<8xf32>
    %39 = vector.shape_cast %38 : vector<8xf32> to vector<8x1xf32>
    %40 = tpu.reciprocal %39 {approx = true} : vector<8x1xf32> -> vector<8x1xf32>
    %41 = vector.extract_strided_slice %7 {offsets = [0, 8], sizes = [8, 8], strides = [1, 1]} : vector<8x32xf32> to vector<8x8xf32>
    %cst_22 = arith.constant dense<0.000000e+00> : vector<8x8xf32>
    %42 = tpu.matmul %37, %41, %cst_22 {dimension_numbers = #tpu.dot_dimension_numbers<[1], [0], [0], [1], [0, 0, 1, 1], [], []>} : vector<8x8xf32>, vector<8x8xf32>, vector<8x8xf32> -> vector<8x8xf32>
    %43 = vector.broadcast %40 : vector<8x1xf32> to vector<8x8xf32>
    %44 = arith.mulf %42, %43 : vector<8x8xf32>
    %c0_23 = arith.constant 0 : index
    %c8 = arith.constant 8 : index
    %45 = vector.load %arg16[%c0_23, %c8] : memref<8x32xf32, #tpu.memory_space<vmem>>, vector<8x8xf32>
    tpu.vector_store %arg16[%c0_23, %c8], %44 {strides = array<i32>} : memref<8x32xf32, #tpu.memory_space<vmem>>, vector<8x8xf32>,
    %46 = vector.extract_strided_slice %3 {offsets = [0, 16], sizes = [8, 8], strides = [1, 1]} : vector<8x32xf32> to vector<8x8xf32>
    %47 = vector.extract_strided_slice %5 {offsets = [0, 16], sizes = [8, 8], strides = [1, 1]} : vector<8x32xf32> to vector<8x8xf32>
    %cst_24 = arith.constant dense<0.000000e+00> : vector<8x8xf32>
    %48 = tpu.matmul %46, %47, %cst_24 {dimension_numbers = #tpu.dot_dimension_numbers<[1], [1], [0], [0], [0, 0, 1, 0], [], []>} : vector<8x8xf32>, vector<8x8xf32>, vector<8x8xf32> -> vector<8x8xf32>
    %49 = vector.broadcast %9 : vector<1x8xf32> to vector<8x8xf32>
    %50 = arith.addf %48, %49 : vector<8x8xf32>
    %cst_25 = arith.constant dense<0xFF800000> : vector<8xf32>
    %51 = vector.multi_reduction <maximumf>, %50, %cst_25 [1] : vector<8x8xf32> to vector<8xf32>
    %52 = vector.shape_cast %51 : vector<8xf32> to vector<8x1xf32>
    %53 = vector.broadcast %52 : vector<8x1xf32> to vector<8x8xf32>
    %54 = arith.subf %50, %53 : vector<8x8xf32>
    %55 = math.exp %54 : vector<8x8xf32>
    %cst_26 = arith.constant dense<0.000000e+00> : vector<8xf32>
    %56 = vector.multi_reduction <add>, %55, %cst_26 [1] : vector<8x8xf32> to vector<8xf32>
    %57 = vector.shape_cast %56 : vector<8xf32> to vector<8x1xf32>
    %58 = tpu.reciprocal %57 {approx = true} : vector<8x1xf32> -> vector<8x1xf32>
    %59 = vector.extract_strided_slice %7 {offsets = [0, 16], sizes = [8, 8], strides = [1, 1]} : vector<8x32xf32> to vector<8x8xf32>
    %cst_27 = arith.constant dense<0.000000e+00> : vector<8x8xf32>
    %60 = tpu.matmul %55, %59, %cst_27 {dimension_numbers = #tpu.dot_dimension_numbers<[1], [0], [0], [1], [0, 0, 1, 1], [], []>} : vector<8x8xf32>, vector<8x8xf32>, vector<8x8xf32> -> vector<8x8xf32>
    %61 = vector.broadcast %58 : vector<8x1xf32> to vector<8x8xf32>
    %62 = arith.mulf %60, %61 : vector<8x8xf32>
    %c0_28 = arith.constant 0 : index
    %c16 = arith.constant 16 : index
    %63 = vector.load %arg16[%c0_28, %c16] : memref<8x32xf32, #tpu.memory_space<vmem>>, vector<8x8xf32>
    tpu.vector_store %arg16[%c0_28, %c16], %62 {strides = array<i32>} : memref<8x32xf32, #tpu.memory_space<vmem>>, vector<8x8xf32>,
    %64 = vector.extract_strided_slice %3 {offsets = [0, 24], sizes = [8, 8], strides = [1, 1]} : vector<8x32xf32> to vector<8x8xf32>
    %65 = vector.extract_strided_slice %5 {offsets = [0, 24], sizes = [8, 8], strides = [1, 1]} : vector<8x32xf32> to vector<8x8xf32>
    %cst_29 = arith.constant dense<0.000000e+00> : vector<8x8xf32>
    %66 = tpu.matmul %64, %65, %cst_29 {dimension_numbers = #tpu.dot_dimension_numbers<[1], [1], [0], [0], [0, 0, 1, 0], [], []>} : vector<8x8xf32>, vector<8x8xf32>, vector<8x8xf32> -> vector<8x8xf32>
    %67 = vector.broadcast %9 : vector<1x8xf32> to vector<8x8xf32>
    %68 = arith.addf %66, %67 : vector<8x8xf32>
    %cst_30 = arith.constant dense<0xFF800000> : vector<8xf32>
    %69 = vector.multi_reduction <maximumf>, %68, %cst_30 [1] : vector<8x8xf32> to vector<8xf32>
    %70 = vector.shape_cast %69 : vector<8xf32> to vector<8x1xf32>
    %71 = vector.broadcast %70 : vector<8x1xf32> to vector<8x8xf32>
    %72 = arith.subf %68, %71 : vector<8x8xf32>
    %73 = math.exp %72 : vector<8x8xf32>
    %cst_31 = arith.constant dense<0.000000e+00> : vector<8xf32>
    %74 = vector.multi_reduction <add>, %73, %cst_31 [1] : vector<8x8xf32> to vector<8xf32>
    %75 = vector.shape_cast %74 : vector<8xf32> to vector<8x1xf32>
    %76 = tpu.reciprocal %75 {approx = true} : vector<8x1xf32> -> vector<8x1xf32>
    %77 = vector.extract_strided_slice %7 {offsets = [0, 24], sizes = [8, 8], strides = [1, 1]} : vector<8x32xf32> to vector<8x8xf32>
    %cst_32 = arith.constant dense<0.000000e+00> : vector<8x8xf32>
    %78 = tpu.matmul %73, %77, %cst_32 {dimension_numbers = #tpu.dot_dimension_numbers<[1], [0], [0], [1], [0, 0, 1, 1], [], []>} : vector<8x8xf32>, vector<8x8xf32>, vector<8x8xf32> -> vector<8x8xf32>
    %79 = vector.broadcast %76 : vector<8x1xf32> to vector<8x8xf32>
    %80 = arith.mulf %78, %79 : vector<8x8xf32>
    %c0_33 = arith.constant 0 : index
    %c24 = arith.constant 24 : index
    %81 = vector.load %arg16[%c0_33, %c24] : memref<8x32xf32, #tpu.memory_space<vmem>>, vector<8x8xf32>
    tpu.vector_store %arg16[%c0_33, %c24], %80 {strides = array<i32>} : memref<8x32xf32, #tpu.memory_space<vmem>>, vector<8x8xf32>,
    %c0_34 = arith.constant 0 : index
    %c0_35 = arith.constant 0 : index
    %82 = vector.load %arg16[%c0_34, %c0_35] : memref<8x32xf32, #tpu.memory_space<vmem>>, vector<8x32xf32>
    %c0_36 = arith.constant 0 : index
    %c0_37 = arith.constant 0 : index
    %83 = vector.load %arg7[%c0_36, %c0_37] : memref<32x32xf32, #tpu.memory_space<vmem>>, vector<32x32xf32>
    %cst_38 = arith.constant dense<0.000000e+00> : vector<8x32xf32>
    %84 = tpu.matmul %82, %83, %cst_38 {dimension_numbers = #tpu.dot_dimension_numbers<[1], [0], [0], [1], [0, 0, 1, 1], [], []>} : vector<8x32xf32>, vector<32x32xf32>, vector<8x32xf32> -> vector<8x32xf32>
    %c0_39 = arith.constant 0 : index
    %c0_40 = arith.constant 0 : index
    %85 = vector.load %arg8[%c0_39, %c0_40] : memref<1x32xf32, #tpu.memory_space<vmem>>, vector<1x32xf32>
    %86 = vector.shape_cast %85 : vector<1x32xf32> to vector<32xf32>
    %87 = vector.shape_cast %86 : vector<32xf32> to vector<1x32xf32>
    %88 = vector.broadcast %87 : vector<1x32xf32> to vector<8x32xf32>
    %89 = arith.addf %84, %88 : vector<8x32xf32>
    %90 = arith.addf %1, %89 : vector<8x32xf32>
    %cst_41 = arith.constant dense<0.000000e+00> : vector<8xf32>
    %91 = vector.multi_reduction <add>, %90, %cst_41 [1] : vector<8x32xf32> to vector<8xf32>
    %92 = vector.shape_cast %91 : vector<8xf32> to vector<8x1xf32>
    %cst_42 = arith.constant 3.200000e+01 : f32
    %93 = vector.broadcast %cst_42 : f32 to vector<8x1xf32>
    %94 = arith.divf %92, %93 : vector<8x1xf32>
    %95 = vector.broadcast %94 : vector<8x1xf32> to vector<8x32xf32>
    %96 = arith.subf %90, %95 : vector<8x32xf32>
    %97 = arith.mulf %96, %96 : vector<8x32xf32>
    %cst_43 = arith.constant dense<0.000000e+00> : vector<8xf32>
    %98 = vector.multi_reduction <add>, %97, %cst_43 [1] : vector<8x32xf32> to vector<8xf32>
    %99 = vector.shape_cast %98 : vector<8xf32> to vector<8x1xf32>
    %cst_44 = arith.constant 3.200000e+01 : f32
    %100 = vector.broadcast %cst_44 : f32 to vector<8x1xf32>
    %101 = arith.divf %99, %100 : vector<8x1xf32>
    %102 = vector.broadcast %94 : vector<8x1xf32> to vector<8x32xf32>
    %103 = arith.subf %90, %102 : vector<8x32xf32>
    %cst_45 = arith.constant 9.99999997E-7 : f32
    %104 = vector.broadcast %cst_45 : f32 to vector<8x1xf32>
    %105 = arith.addf %101, %104 : vector<8x1xf32>
    %106 = math.rsqrt %105 : vector<8x1xf32>
    %107 = vector.broadcast %106 : vector<8x1xf32> to vector<8x32xf32>
    %108 = arith.mulf %103, %107 : vector<8x32xf32>
    %c0_46 = arith.constant 0 : index
    %c0_47 = arith.constant 0 : index
    %109 = vector.load %arg9[%c0_46, %c0_47] : memref<1x32xf32, #tpu.memory_space<vmem>>, vector<1x32xf32>
    %110 = vector.shape_cast %109 : vector<1x32xf32> to vector<32xf32>
    %111 = vector.shape_cast %110 : vector<32xf32> to vector<1x32xf32>
    %112 = vector.broadcast %111 : vector<1x32xf32> to vector<8x32xf32>
    %113 = arith.mulf %108, %112 : vector<8x32xf32>
    %c0_48 = arith.constant 0 : index
    %c0_49 = arith.constant 0 : index
    %114 = vector.load %arg10[%c0_48, %c0_49] : memref<1x32xf32, #tpu.memory_space<vmem>>, vector<1x32xf32>
    %115 = vector.shape_cast %114 : vector<1x32xf32> to vector<32xf32>
    %116 = vector.shape_cast %115 : vector<32xf32> to vector<1x32xf32>
    %117 = vector.broadcast %116 : vector<1x32xf32> to vector<8x32xf32>
    %118 = arith.addf %113, %117 : vector<8x32xf32>
    %c0_50 = arith.constant 0 : index
    %c0_51 = arith.constant 0 : index
    %119 = vector.load %arg11[%c0_50, %c0_51] : memref<32x64xf32, #tpu.memory_space<vmem>>, vector<32x64xf32>
    %cst_52 = arith.constant dense<0.000000e+00> : vector<8x64xf32>
    %120 = tpu.matmul %118, %119, %cst_52 {dimension_numbers = #tpu.dot_dimension_numbers<[1], [0], [0], [1], [0, 0, 1, 1], [], []>} : vector<8x32xf32>, vector<32x64xf32>, vector<8x64xf32> -> vector<8x64xf32>
    %c0_53 = arith.constant 0 : index
    %c0_54 = arith.constant 0 : index
    %121 = vector.load %arg12[%c0_53, %c0_54] : memref<1x64xf32, #tpu.memory_space<vmem>>, vector<1x64xf32>
    %122 = vector.shape_cast %121 : vector<1x64xf32> to vector<64xf32>
    %123 = vector.shape_cast %122 : vector<64xf32> to vector<1x64xf32>
    %124 = vector.broadcast %123 : vector<1x64xf32> to vector<8x64xf32>
    %125 = arith.addf %120, %124 : vector<8x64xf32>
    %cst_55 = arith.constant 0.000000e+00 : f32
    %126 = vector.broadcast %cst_55 : f32 to vector<8x64xf32>
    %127 = arith.maximumf %125, %126 : vector<8x64xf32>
    %c0_56 = arith.constant 0 : index
    %c0_57 = arith.constant 0 : index
    %128 = vector.load %arg13[%c0_56, %c0_57] : memref<64x32xf32, #tpu.memory_space<vmem>>, vector<64x32xf32>
    %cst_58 = arith.constant dense<0.000000e+00> : vector<8x32xf32>
    %129 = tpu.matmul %127, %128, %cst_58 {dimension_numbers = #tpu.dot_dimension_numbers<[1], [0], [0], [1], [0, 0, 1, 1], [], []>} : vector<8x64xf32>, vector<64x32xf32>, vector<8x32xf32> -> vector<8x32xf32>
    %c0_59 = arith.constant 0 : index
    %c0_60 = arith.constant 0 : index
    %130 = vector.load %arg14[%c0_59, %c0_60] : memref<1x32xf32, #tpu.memory_space<vmem>>, vector<1x32xf32>
    %131 = vector.shape_cast %130 : vector<1x32xf32> to vector<32xf32>
    %132 = vector.shape_cast %131 : vector<32xf32> to vector<1x32xf32>
    %133 = vector.broadcast %132 : vector<1x32xf32> to vector<8x32xf32>
    %134 = arith.addf %129, %133 : vector<8x32xf32>
    %135 = arith.addf %90, %134 : vector<8x32xf32>
    %c0_61 = arith.constant 0 : index
    %c0_62 = arith.constant 0 : index
    %c0_63 = arith.constant 0 : index
    %136 = vector.load %arg15[%c0_61, %c0_62, %c0_63] : memref<1x8x32xf32, #tpu.memory_space<vmem>>, vector<1x8x32xf32>
    %137 = vector.shape_cast %136 : vector<1x8x32xf32> to vector<8x32xf32>
    %138 = vector.shape_cast %135 : vector<8x32xf32> to vector<1x8x32xf32>
    tpu.vector_store %arg15[%c0_61, %c0_62, %c0_63], %138 {strides = array<i32>} : memref<1x8x32xf32, #tpu.memory_space<vmem>>, vector<1x8x32xf32>,
    return
  }
  func.func @transform_0(%arg0: i32, %arg1: i32) -> (i32, i32, i32) {
    %c0_i32 = arith.constant 0 : i32
    %c0_i32_0 = arith.constant 0 : i32
    return %arg0, %arg1, %c0_i32 : i32, i32, i32
  }
  func.func @transform_1(%arg0: i32, %arg1: i32) -> (i32, i32, i32) {
    %c0_i32 = arith.constant 0 : i32
    %c0_i32_0 = arith.constant 0 : i32
    return %arg0, %arg1, %c0_i32 : i32, i32, i32
  }
  func.func @transform_2(%arg0: i32, %arg1: i32) -> (i32, i32, i32) {
    %c0_i32 = arith.constant 0 : i32
    %c0_i32_0 = arith.constant 0 : i32
    %c0_i32_1 = arith.constant 0 : i32
    return %arg0, %c0_i32, %c0_i32_0 : i32, i32, i32
  }
  func.func @transform_3(%arg0: i32, %arg1: i32) -> (i32, i32, i32) {
    %c0_i32 = arith.constant 0 : i32
    %c0_i32_0 = arith.constant 0 : i32
    %c0_i32_1 = arith.constant 0 : i32
    return %arg0, %c0_i32, %c0_i32_0 : i32, i32, i32
  }
  func.func @transform_4(%arg0: i32, %arg1: i32) -> (i32, i32, i32) {
    %c0_i32 = arith.constant 0 : i32
    %c0_i32_0 = arith.constant 0 : i32
    %c0_i32_1 = arith.constant 0 : i32
    return %arg0, %c0_i32, %c0_i32_0 : i32, i32, i32
  }
  func.func @transform_5(%arg0: i32, %arg1: i32) -> (i32, i32) {
    %c0_i32 = arith.constant 0 : i32
    %c0_i32_0 = arith.constant 0 : i32
    %c0_i32_1 = arith.constant 0 : i32
    return %c0_i32, %c0_i32_0 : i32, i32
  }
  func.func @transform_6(%arg0: i32, %arg1: i32) -> (i32, i32) {
    %c0_i32 = arith.constant 0 : i32
    %c0_i32_0 = arith.constant 0 : i32
    %c0_i32_1 = arith.constant 0 : i32
    return %c0_i32, %c0_i32_0 : i32, i32
  }
  func.func @transform_7(%arg0: i32, %arg1: i32) -> (i32, i32) {
    %c0_i32 = arith.constant 0 : i32
    %c0_i32_0 = arith.constant 0 : i32
    %c0_i32_1 = arith.constant 0 : i32
    return %c0_i32, %c0_i32_0 : i32, i32
  }
  func.func @transform_8(%arg0: i32, %arg1: i32) -> (i32, i32) {
    %c0_i32 = arith.constant 0 : i32
    %c0_i32_0 = arith.constant 0 : i32
    %c0_i32_1 = arith.constant 0 : i32
    return %c0_i32, %c0_i32_0 : i32, i32
  }
  func.func @transform_9(%arg0: i32, %arg1: i32) -> (i32, i32) {
    %c0_i32 = arith.constant 0 : i32
    %c0_i32_0 = arith.constant 0 : i32
    %c0_i32_1 = arith.constant 0 : i32
    return %c0_i32, %c0_i32_0 : i32, i32
  }
  func.func @transform_10(%arg0: i32, %arg1: i32) -> (i32, i32) {
    %c0_i32 = arith.constant 0 : i32
    %c0_i32_0 = arith.constant 0 : i32
    %c0_i32_1 = arith.constant 0 : i32
    return %c0_i32, %c0_i32_0 : i32, i32
  }
  func.func @transform_11(%arg0: i32, %arg1: i32) -> (i32, i32) {
    %c0_i32 = arith.constant 0 : i32
    %c0_i32_0 = arith.constant 0 : i32
    %c0_i32_1 = arith.constant 0 : i32
    return %c0_i32, %c0_i32_0 : i32, i32
  }
  func.func @transform_12(%arg0: i32, %arg1: i32) -> (i32, i32) {
    %c0_i32 = arith.constant 0 : i32
    %c0_i32_0 = arith.constant 0 : i32
    %c0_i32_1 = arith.constant 0 : i32
    return %c0_i32, %c0_i32_0 : i32, i32
  }
  func.func @transform_13(%arg0: i32, %arg1: i32) -> (i32, i32, i32) {
    %c0_i32 = arith.constant 0 : i32
    %c0_i32_0 = arith.constant 0 : i32
    return %arg0, %arg1, %c0_i32 : i32, i32, i32
  }
}

module attributes {stable_mosaic.version = 11 : i64} {
  func.func @_encoder_layer_kernel(%arg0: i32, %arg1: i32, %arg2: memref<1x8x32xf32, #tpu.memory_space<vmem>>, %arg3: memref<1x8x32xf32, #tpu.memory_space<vmem>>, %arg4: memref<1x8x32xf32, #tpu.memory_space<vmem>>, %arg5: memref<1x8x32xf32, #tpu.memory_space<vmem>>, %arg6: memref<1x1x8xf32, #tpu.memory_space<vmem>>, %arg7: memref<32x32xf32, #tpu.memory_space<vmem>>, %arg8: memref<1x32xf32, #tpu.memory_space<vmem>>, %arg9: memref<1x32xf32, #tpu.memory_space<vmem>>, %arg10: memref<1x32xf32, #tpu.memory_space<vmem>>, %arg11: memref<32x64xf32, #tpu.memory_space<vmem>>, %arg12: memref<1x64xf32, #tpu.memory_space<vmem>>, %arg13: memref<64x32xf32, #tpu.memory_space<vmem>>, %arg14: memref<1x32xf32, #tpu.memory_space<vmem>>, %arg15: memref<1x8x32xf32, #tpu.memory_space<vmem>>, %arg16: memref<8x32xf32, #tpu.memory_space<vmem>>) attributes {dimension_semantics = [#tpu.dimension_semantics<parallel>, #tpu.dimension_semantics<parallel>], iteration_bounds = array<i64: 2, 1>, scalar_prefetch = 0 : i64, scratch_operands = 1 : i64, tpu.core_type = #tpu.core_type<tc>, window_params = [{transform_indices = @transform_0, window_bounds = array<i64: 1, 8, 32>}, {transform_indices = @transform_1, window_bounds = array<i64: 1, 8, 32>}, {transform_indices = @transform_2, window_bounds = array<i64: 1, 8, 32>}, {transform_indices = @transform_3, window_bounds = array<i64: 1, 8, 32>}, {transform_indices = @transform_4, window_bounds = array<i64: 1, 1, 8>}, {pipeline_mode = #tpu.pipeline_mode<synchronous>, transform_indices = @transform_5, window_bounds = array<i64: 32, 32>}, {pipeline_mode = #tpu.pipeline_mode<synchronous>, transform_indices = @transform_6, window_bounds = array<i64: 1, 32>}, {pipeline_mode = #tpu.pipeline_mode<synchronous>, transform_indices = @transform_7, window_bounds = array<i64: 1, 32>}, {pipeline_mode = #tpu.pipeline_mode<synchronous>, transform_indices = @transform_8, window_bounds = array<i64: 1, 32>}, {pipeline_mode = #tpu.pipeline_mode<synchronous>, transform_indices = @transform_9, window_bounds = array<i64: 32, 64>}, {pipeline_mode = #tpu.pipeline_mode<synchronous>, transform_indices = @transform_10, window_bounds = array<i64: 1, 64>}, {pipeline_mode = #tpu.pipeline_mode<synchronous>, transform_indices = @transform_11, window_bounds = array<i64: 64, 32>}, {pipeline_mode = #tpu.pipeline_mode<synchronous>, transform_indices = @transform_12, window_bounds = array<i64: 1, 32>}, {transform_indices = @transform_13, window_bounds = array<i64: 1, 8, 32>}]} {
    %c0 = arith.constant 0 : index
    %c0_0 = arith.constant 0 : index
    %c0_1 = arith.constant 0 : index
    %0 = vector.load %arg2[%c0, %c0_0, %c0_1] : memref<1x8x32xf32, #tpu.memory_space<vmem>>, vector<1x8x32xf32>
    %1 = vector.shape_cast %0 : vector<1x8x32xf32> to vector<8x32xf32>
    %c0_2 = arith.constant 0 : index
    %c0_3 = arith.constant 0 : index
    %c0_4 = arith.constant 0 : index
    %2 = vector.load %arg3[%c0_2, %c0_3, %c0_4] : memref<1x8x32xf32, #tpu.memory_space<vmem>>, vector<1x8x32xf32>
    %3 = vector.shape_cast %2 : vector<1x8x32xf32> to vector<8x32xf32>
    %c0_5 = arith.constant 0 : index
    %c0_6 = arith.constant 0 : index
    %c0_7 = arith.constant 0 : index
    %4 = vector.load %arg4[%c0_5, %c0_6, %c0_7] : memref<1x8x32xf32, #tpu.memory_space<vmem>>, vector<1x8x32xf32>
    %5 = vector.shape_cast %4 : vector<1x8x32xf32> to vector<8x32xf32>
    %c0_8 = arith.constant 0 : index
    %c0_9 = arith.constant 0 : index
    %c0_10 = arith.constant 0 : index
    %6 = vector.load %arg5[%c0_8, %c0_9, %c0_10] : memref<1x8x32xf32, #tpu.memory_space<vmem>>, vector<1x8x32xf32>
    %7 = vector.shape_cast %6 : vector<1x8x32xf32> to vector<8x32xf32>
    %c0_11 = arith.constant 0 : index
    %c0_12 = arith.constant 0 : index
    %c0_13 = arith.constant 0 : index
    %8 = vector.load %arg6[%c0_11, %c0_12, %c0_13] : memref<1x1x8xf32, #tpu.memory_space<vmem>>, vector<1x1x8xf32>
    %9 = vector.shape_cast %8 : vector<1x1x8xf32> to vector<1x8xf32>
    %10 = vector.extract_strided_slice %3 {offsets = [0, 0], sizes = [8, 8], strides = [1, 1]} : vector<8x32xf32> to vector<8x8xf32>
    %11 = vector.extract_strided_slice %5 {offsets = [0, 0], sizes = [8, 8], strides = [1, 1]} : vector<8x32xf32> to vector<8x8xf32>
    %cst = arith.constant dense<0.000000e+00> : vector<8x8xf32>
    %12 = tpu.matmul %10, %11, %cst {dimension_numbers = #tpu.dot_dimension_numbers<[1], [1], [0], [0], [0, 0, 1, 0], [], []>} : vector<8x8xf32>, vector<8x8xf32>, vector<8x8xf32> -> vector<8x8xf32>
    %13 = vector.broadcast %9 : vector<1x8xf32> to vector<8x8xf32>
    %14 = arith.addf %12, %13 : vector<8x8xf32>
    %cst_14 = arith.constant dense<0xFF800000> : vector<8xf32>
    %15 = vector.multi_reduction <maximumf>, %14, %cst_14 [1] : vector<8x8xf32> to vector<8xf32>
    %16 = vector.shape_cast %15 : vector<8xf32> to vector<8x1xf32>
    %17 = vector.broadcast %16 : vector<8x1xf32> to vector<8x8xf32>
    %18 = arith.subf %14, %17 : vector<8x8xf32>
    %19 = math.exp %18 : vector<8x8xf32>
    %cst_15 = arith.constant dense<0.000000e+00> : vector<8xf32>
    %20 = vector.multi_reduction <add>, %19, %cst_15 [1] : vector<8x8xf32> to vector<8xf32>
    %21 = vector.shape_cast %20 : vector<8xf32> to vector<8x1xf32>
    %22 = tpu.reciprocal %21 {approx = true} : vector<8x1xf32> -> vector<8x1xf32>
    %23 = vector.extract_strided_slice %7 {offsets = [0, 0], sizes = [8, 8], strides = [1, 1]} : vector<8x32xf32> to vector<8x8xf32>
    %cst_16 = arith.constant dense<0.000000e+00> : vector<8x8xf32>
    %24 = tpu.matmul %19, %23, %cst_16 {dimension_numbers = #tpu.dot_dimension_numbers<[1], [0], [0], [1], [0, 0, 1, 1], [], []>} : vector<8x8xf32>, vector<8x8xf32>, vector<8x8xf32> -> vector<8x8xf32>
    %25 = vector.broadcast %22 : vector<8x1xf32> to vector<8x8xf32>
    %26 = arith.mulf %24, %25 : vector<8x8xf32>
    %c0_17 = arith.constant 0 : index
    %c0_18 = arith.constant 0 : index
    %27 = vector.load %arg16[%c0_17, %c0_18] : memref<8x32xf32, #tpu.memory_space<vmem>>, vector<8x8xf32>
    tpu.vector_store %arg16[%c0_17, %c0_18], %26 {strides = array<i32>} : memref<8x32xf32, #tpu.memory_space<vmem>>, vector<8x8xf32>,
    %28 = vector.extract_strided_slice %3 {offsets = [0, 8], sizes = [8, 8], strides = [1, 1]} : vector<8x32xf32> to vector<8x8xf32>
    %29 = vector.extract_strided_slice %5 {offsets = [0, 8], sizes = [8, 8], strides = [1, 1]} : vector<8x32xf32> to vector<8x8xf32>
    %cst_19 = arith.constant dense<0.000000e+00> : vector<8x8xf32>
    %30 = tpu.matmul %28, %29, %cst_19 {dimension_numbers = #tpu.dot_dimension_numbers<[1], [1], [0], [0], [0, 0, 1, 0], [], []>} : vector<8x8xf32>, vector<8x8xf32>, vector<8x8xf32> -> vector<8x8xf32>
    %31 = vector.broadcast %9 : vector<1x8xf32> to vector<8x8xf32>
    %32 = arith.addf %30, %31 : vector<8x8xf32>
    %cst_20 = arith.constant dense<0xFF800000> : vector<8xf32>
    %33 = vector.multi_reduction <maximumf>, %32, %cst_20 [1] : vector<8x8xf32> to vector<8xf32>
    %34 = vector.shape_cast %33 : vector<8xf32> to vector<8x1xf32>
    %35 = vector.broadcast %34 : vector<8x1xf32> to vector<8x8xf32>
    %36 = arith.subf %32, %35 : vector<8x8xf32>
    %37 = math.exp %36 : vector<8x8xf32>
    %cst_21 = arith.constant dense<0.000000e+00> : vector<8xf32>
    %38 = vector.multi_reduction <add>, %37, %cst_21 [1] : vector<8x8xf32> to vector<8xf32>
    %39 = vector.shape_cast %38 : vector<8xf32> to vector<8x1xf32>
    %40 = tpu.reciprocal %39 {approx = true} : vector<8x1xf32> -> vector<8x1xf32>
    %41 = vector.extract_strided_slice %7 {offsets = [0, 8], sizes = [8, 8], strides = [1, 1]} : vector<8x32xf32> to vector<8x8xf32>
    %cst_22 = arith.constant dense<0.000000e+00> : vector<8x8xf32>
    %42 = tpu.matmul %37, %41, %cst_22 {dimension_numbers = #tpu.dot_dimension_numbers<[1], [0], [0], [1], [0, 0, 1, 1], [], []>} : vector<8x8xf32>, vector<8x8xf32>, vector<8x8xf32> -> vector<8x8xf32>
    %43 = vector.broadcast %40 : vector<8x1xf32> to vector<8x8xf32>
    %44 = arith.mulf %42, %43 : vector<8x8xf32>
    %c0_23 = arith.constant 0 : index
    %c8 = arith.constant 8 : index
    %45 = vector.load %arg16[%c0_23, %c8] : memref<8x32xf32, #tpu.memory_space<vmem>>, vector<8x8xf32>
    tpu.vector_store %arg16[%c0_23, %c8], %44 {strides = array<i32>} : memref<8x32xf32, #tpu.memory_space<vmem>>, vector<8x8xf32>,
    %46 = vector.extract_strided_slice %3 {offsets = [0, 16], sizes = [8, 8], strides = [1, 1]} : vector<8x32xf32> to vector<8x8xf32>
    %47 = vector.extract_strided_slice %5 {offsets = [0, 16], sizes = [8, 8], strides = [1, 1]} : vector<8x32xf32> to vector<8x8xf32>
    %cst_24 = arith.constant dense<0.000000e+00> : vector<8x8xf32>
    %48 = tpu.matmul %46, %47, %cst_24 {dimension_numbers = #tpu.dot_dimension_numbers<[1], [1], [0], [0], [0, 0, 1, 0], [], []>} : vector<8x8xf32>, vector<8x8xf32>, vector<8x8xf32> -> vector<8x8xf32>
    %49 = vector.broadcast %9 : vector<1x8xf32> to vector<8x8xf32>
    %50 = arith.addf %48, %49 : vector<8x8xf32>
    %cst_25 = arith.constant dense<0xFF800000> : vector<8xf32>
    %51 = vector.multi_reduction <maximumf>, %50, %cst_25 [1] : vector<8x8xf32> to vector<8xf32>
    %52 = vector.shape_cast %51 : vector<8xf32> to vector<8x1xf32>
    %53 = vector.broadcast %52 : vector<8x1xf32> to vector<8x8xf32>
    %54 = arith.subf %50, %53 : vector<8x8xf32>
    %55 = math.exp %54 : vector<8x8xf32>
    %cst_26 = arith.constant dense<0.000000e+00> : vector<8xf32>
    %56 = vector.multi_reduction <add>, %55, %cst_26 [1] : vector<8x8xf32> to vector<8xf32>
    %57 = vector.shape_cast %56 : vector<8xf32> to vector<8x1xf32>
    %58 = tpu.reciprocal %57 {approx = true} : vector<8x1xf32> -> vector<8x1xf32>
    %59 = vector.extract_strided_slice %7 {offsets = [0, 16], sizes = [8, 8], strides = [1, 1]} : vector<8x32xf32> to vector<8x8xf32>
    %cst_27 = arith.constant dense<0.000000e+00> : vector<8x8xf32>
    %60 = tpu.matmul %55, %59, %cst_27 {dimension_numbers = #tpu.dot_dimension_numbers<[1], [0], [0], [1], [0, 0, 1, 1], [], []>} : vector<8x8xf32>, vector<8x8xf32>, vector<8x8xf32> -> vector<8x8xf32>
    %61 = vector.broadcast %58 : vector<8x1xf32> to vector<8x8xf32>
    %62 = arith.mulf %60, %61 : vector<8x8xf32>
    %c0_28 = arith.constant 0 : index
    %c16 = arith.constant 16 : index
    %63 = vector.load %arg16[%c0_28, %c16] : memref<8x32xf32, #tpu.memory_space<vmem>>, vector<8x8xf32>
    tpu.vector_store %arg16[%c0_28, %c16], %62 {strides = array<i32>} : memref<8x32xf32, #tpu.memory_space<vmem>>, vector<8x8xf32>,
    %64 = vector.extract_strided_slice %3 {offsets = [0, 24], sizes = [8, 8], strides = [1, 1]} : vector<8x32xf32> to vector<8x8xf32>
    %65 = vector.extract_strided_slice %5 {offsets = [0, 24], sizes = [8, 8], strides = [1, 1]} : vector<8x32xf32> to vector<8x8xf32>
    %cst_29 = arith.constant dense<0.000000e+00> : vector<8x8xf32>
    %66 = tpu.matmul %64, %65, %cst_29 {dimension_numbers = #tpu.dot_dimension_numbers<[1], [1], [0], [0], [0, 0, 1, 0], [], []>} : vector<8x8xf32>, vector<8x8xf32>, vector<8x8xf32> -> vector<8x8xf32>
    %67 = vector.broadcast %9 : vector<1x8xf32> to vector<8x8xf32>
    %68 = arith.addf %66, %67 : vector<8x8xf32>
    %cst_30 = arith.constant dense<0xFF800000> : vector<8xf32>
    %69 = vector.multi_reduction <maximumf>, %68, %cst_30 [1] : vector<8x8xf32> to vector<8xf32>
    %70 = vector.shape_cast %69 : vector<8xf32> to vector<8x1xf32>
    %71 = vector.broadcast %70 : vector<8x1xf32> to vector<8x8xf32>
    %72 = arith.subf %68, %71 : vector<8x8xf32>
    %73 = math.exp %72 : vector<8x8xf32>
    %cst_31 = arith.constant dense<0.000000e+00> : vector<8xf32>
    %74 = vector.multi_reduction <add>, %73, %cst_31 [1] : vector<8x8xf32> to vector<8xf32>
    %75 = vector.shape_cast %74 : vector<8xf32> to vector<8x1xf32>
    %76 = tpu.reciprocal %75 {approx = true} : vector<8x1xf32> -> vector<8x1xf32>
    %77 = vector.extract_strided_slice %7 {offsets = [0, 24], sizes = [8, 8], strides = [1, 1]} : vector<8x32xf32> to vector<8x8xf32>
    %cst_32 = arith.constant dense<0.000000e+00> : vector<8x8xf32>
    %78 = tpu.matmul %73, %77, %cst_32 {dimension_numbers = #tpu.dot_dimension_numbers<[1], [0], [0], [1], [0, 0, 1, 1], [], []>} : vector<8x8xf32>, vector<8x8xf32>, vector<8x8xf32> -> vector<8x8xf32>
    %79 = vector.broadcast %76 : vector<8x1xf32> to vector<8x8xf32>
    %80 = arith.mulf %78, %79 : vector<8x8xf32>
    %c0_33 = arith.constant 0 : index
    %c24 = arith.constant 24 : index
    %81 = vector.load %arg16[%c0_33, %c24] : memref<8x32xf32, #tpu.memory_space<vmem>>, vector<8x8xf32>
    tpu.vector_store %arg16[%c0_33, %c24], %80 {strides = array<i32>} : memref<8x32xf32, #tpu.memory_space<vmem>>, vector<8x8xf32>,
    %c0_34 = arith.constant 0 : index
    %c0_35 = arith.constant 0 : index
    %82 = vector.load %arg16[%c0_34, %c0_35] : memref<8x32xf32, #tpu.memory_space<vmem>>, vector<8x32xf32>
    %c0_36 = arith.constant 0 : index
    %c0_37 = arith.constant 0 : index
    %83 = vector.load %arg7[%c0_36, %c0_37] : memref<32x32xf32, #tpu.memory_space<vmem>>, vector<32x32xf32>
    %cst_38 = arith.constant dense<0.000000e+00> : vector<8x32xf32>
    %84 = tpu.matmul %82, %83, %cst_38 {dimension_numbers = #tpu.dot_dimension_numbers<[1], [0], [0], [1], [0, 0, 1, 1], [], []>} : vector<8x32xf32>, vector<32x32xf32>, vector<8x32xf32> -> vector<8x32xf32>
    %c0_39 = arith.constant 0 : index
    %c0_40 = arith.constant 0 : index
    %85 = vector.load %arg8[%c0_39, %c0_40] : memref<1x32xf32, #tpu.memory_space<vmem>>, vector<1x32xf32>
    %86 = vector.shape_cast %85 : vector<1x32xf32> to vector<32xf32>
    %87 = vector.shape_cast %86 : vector<32xf32> to vector<1x32xf32>
    %88 = vector.broadcast %87 : vector<1x32xf32> to vector<8x32xf32>
    %89 = arith.addf %84, %88 : vector<8x32xf32>
    %90 = arith.addf %1, %89 : vector<8x32xf32>
    %cst_41 = arith.constant dense<0.000000e+00> : vector<8xf32>
    %91 = vector.multi_reduction <add>, %90, %cst_41 [1] : vector<8x32xf32> to vector<8xf32>
    %92 = vector.shape_cast %91 : vector<8xf32> to vector<8x1xf32>
    %cst_42 = arith.constant 3.200000e+01 : f32
    %93 = vector.broadcast %cst_42 : f32 to vector<8x1xf32>
    %94 = arith.divf %92, %93 : vector<8x1xf32>
    %95 = vector.broadcast %94 : vector<8x1xf32> to vector<8x32xf32>
    %96 = arith.subf %90, %95 : vector<8x32xf32>
    %97 = arith.mulf %96, %96 : vector<8x32xf32>
    %cst_43 = arith.constant dense<0.000000e+00> : vector<8xf32>
    %98 = vector.multi_reduction <add>, %97, %cst_43 [1] : vector<8x32xf32> to vector<8xf32>
    %99 = vector.shape_cast %98 : vector<8xf32> to vector<8x1xf32>
    %cst_44 = arith.constant 3.200000e+01 : f32
    %100 = vector.broadcast %cst_44 : f32 to vector<8x1xf32>
    %101 = arith.divf %99, %100 : vector<8x1xf32>
    %102 = vector.broadcast %94 : vector<8x1xf32> to vector<8x32xf32>
    %103 = arith.subf %90, %102 : vector<8x32xf32>
    %cst_45 = arith.constant 9.99999997E-7 : f32
    %104 = vector.broadcast %cst_45 : f32 to vector<8x1xf32>
    %105 = arith.addf %101, %104 : vector<8x1xf32>
    %106 = math.rsqrt %105 : vector<8x1xf32>
    %107 = vector.broadcast %106 : vector<8x1xf32> to vector<8x32xf32>
    %108 = arith.mulf %103, %107 : vector<8x32xf32>
    %c0_46 = arith.constant 0 : index
    %c0_47 = arith.constant 0 : index
    %109 = vector.load %arg9[%c0_46, %c0_47] : memref<1x32xf32, #tpu.memory_space<vmem>>, vector<1x32xf32>
    %110 = vector.shape_cast %109 : vector<1x32xf32> to vector<32xf32>
    %111 = vector.shape_cast %110 : vector<32xf32> to vector<1x32xf32>
    %112 = vector.broadcast %111 : vector<1x32xf32> to vector<8x32xf32>
    %113 = arith.mulf %108, %112 : vector<8x32xf32>
    %c0_48 = arith.constant 0 : index
    %c0_49 = arith.constant 0 : index
    %114 = vector.load %arg10[%c0_48, %c0_49] : memref<1x32xf32, #tpu.memory_space<vmem>>, vector<1x32xf32>
    %115 = vector.shape_cast %114 : vector<1x32xf32> to vector<32xf32>
    %116 = vector.shape_cast %115 : vector<32xf32> to vector<1x32xf32>
    %117 = vector.broadcast %116 : vector<1x32xf32> to vector<8x32xf32>
    %118 = arith.addf %113, %117 : vector<8x32xf32>
    %c0_50 = arith.constant 0 : index
    %c0_51 = arith.constant 0 : index
    %119 = vector.load %arg11[%c0_50, %c0_51] : memref<32x64xf32, #tpu.memory_space<vmem>>, vector<32x64xf32>
    %cst_52 = arith.constant dense<0.000000e+00> : vector<8x64xf32>
    %120 = tpu.matmul %118, %119, %cst_52 {dimension_numbers = #tpu.dot_dimension_numbers<[1], [0], [0], [1], [0, 0, 1, 1], [], []>} : vector<8x32xf32>, vector<32x64xf32>, vector<8x64xf32> -> vector<8x64xf32>
    %c0_53 = arith.constant 0 : index
    %c0_54 = arith.constant 0 : index
    %121 = vector.load %arg12[%c0_53, %c0_54] : memref<1x64xf32, #tpu.memory_space<vmem>>, vector<1x64xf32>
    %122 = vector.shape_cast %121 : vector<1x64xf32> to vector<64xf32>
    %123 = vector.shape_cast %122 : vector<64xf32> to vector<1x64xf32>
    %124 = vector.broadcast %123 : vector<1x64xf32> to vector<8x64xf32>
    %125 = arith.addf %120, %124 : vector<8x64xf32>
    %cst_55 = arith.constant 0.000000e+00 : f32
    %126 = vector.broadcast %cst_55 : f32 to vector<8x64xf32>
    %127 = arith.maximumf %125, %126 : vector<8x64xf32>
    %c0_56 = arith.constant 0 : index
    %c0_57 = arith.constant 0 : index
    %128 = vector.load %arg13[%c0_56, %c0_57] : memref<64x32xf32, #tpu.memory_space<vmem>>, vector<64x32xf32>
    %cst_58 = arith.constant dense<0.000000e+00> : vector<8x32xf32>
    %129 = tpu.matmul %127, %128, %cst_58 {dimension_numbers = #tpu.dot_dimension_numbers<[1], [0], [0], [1], [0, 0, 1, 1], [], []>} : vector<8x64xf32>, vector<64x32xf32>, vector<8x32xf32> -> vector<8x32xf32>
    %c0_59 = arith.constant 0 : index
    %c0_60 = arith.constant 0 : index
    %130 = vector.load %arg14[%c0_59, %c0_60] : memref<1x32xf32, #tpu.memory_space<vmem>>, vector<1x32xf32>
    %131 = vector.shape_cast %130 : vector<1x32xf32> to vector<32xf32>
    %132 = vector.shape_cast %131 : vector<32xf32> to vector<1x32xf32>
    %133 = vector.broadcast %132 : vector<1x32xf32> to vector<8x32xf32>
    %134 = arith.addf %129, %133 : vector<8x32xf32>
    %135 = arith.addf %90, %134 : vector<8x32xf32>
    %c0_61 = arith.constant 0 : index
    %c0_62 = arith.constant 0 : index
    %c0_63 = arith.constant 0 : index
    %136 = vector.load %arg15[%c0_61, %c0_62, %c0_63] : memref<1x8x32xf32, #tpu.memory_space<vmem>>, vector<1x8x32xf32>
    %137 = vector.shape_cast %136 : vector<1x8x32xf32> to vector<8x32xf32>
    %138 = vector.shape_cast %135 : vector<8x32xf32> to vector<1x8x32xf32>
    tpu.vector_store %arg15[%c0_61, %c0_62, %c0_63], %138 {strides = array<i32>} : memref<1x8x32xf32, #tpu.memory_space<vmem>>, vector<1x8x32xf32>,
    return
  }
  func.func @transform_0(%arg0: i32, %arg1: i32) -> (i32, i32, i32) {
    %c0_i32 = arith.constant 0 : i32
    %c0_i32_0 = arith.constant 0 : i32
    return %arg0, %arg1, %c0_i32 : i32, i32, i32
  }
  func.func @transform_1(%arg0: i32, %arg1: i32) -> (i32, i32, i32) {
    %c0_i32 = arith.constant 0 : i32
    %c0_i32_0 = arith.constant 0 : i32
    return %arg0, %arg1, %c0_i32 : i32, i32, i32
  }
  func.func @transform_2(%arg0: i32, %arg1: i32) -> (i32, i32, i32) {
    %c0_i32 = arith.constant 0 : i32
    %c0_i32_0 = arith.constant 0 : i32
    %c0_i32_1 = arith.constant 0 : i32
    return %arg0, %c0_i32, %c0_i32_0 : i32, i32, i32
  }
  func.func @transform_3(%arg0: i32, %arg1: i32) -> (i32, i32, i32) {
    %c0_i32 = arith.constant 0 : i32
    %c0_i32_0 = arith.constant 0 : i32
    %c0_i32_1 = arith.constant 0 : i32
    return %arg0, %c0_i32, %c0_i32_0 : i32, i32, i32
  }
  func.func @transform_4(%arg0: i32, %arg1: i32) -> (i32, i32, i32) {
    %c0_i32 = arith.constant 0 : i32
    %c0_i32_0 = arith.constant 0 : i32
    %c0_i32_1 = arith.constant 0 : i32
    return %arg0, %c0_i32, %c0_i32_0 : i32, i32, i32
  }
  func.func @transform_5(%arg0: i32, %arg1: i32) -> (i32, i32) {
    %c0_i32 = arith.constant 0 : i32
    %c0_i32_0 = arith.constant 0 : i32
    %c0_i32_1 = arith.constant 0 : i32
    return %c0_i32, %c0_i32_0 : i32, i32
  }
  func.func @transform_6(%arg0: i32, %arg1: i32) -> (i32, i32) {
    %c0_i32 = arith.constant 0 : i32
    %c0_i32_0 = arith.constant 0 : i32
    %c0_i32_1 = arith.constant 0 : i32
    return %c0_i32, %c0_i32_0 : i32, i32
  }
  func.func @transform_7(%arg0: i32, %arg1: i32) -> (i32, i32) {
    %c0_i32 = arith.constant 0 : i32
    %c0_i32_0 = arith.constant 0 : i32
    %c0_i32_1 = arith.constant 0 : i32
    return %c0_i32, %c0_i32_0 : i32, i32
  }
  func.func @transform_8(%arg0: i32, %arg1: i32) -> (i32, i32) {
    %c0_i32 = arith.constant 0 : i32
    %c0_i32_0 = arith.constant 0 : i32
    %c0_i32_1 = arith.constant 0 : i32
    return %c0_i32, %c0_i32_0 : i32, i32
  }
  func.func @transform_9(%arg0: i32, %arg1: i32) -> (i32, i32) {
    %c0_i32 = arith.constant 0 : i32
    %c0_i32_0 = arith.constant 0 : i32
    %c0_i32_1 = arith.constant 0 : i32
    return %c0_i32, %c0_i32_0 : i32, i32
  }
  func.func @transform_10(%arg0: i32, %arg1: i32) -> (i32, i32) {
    %c0_i32 = arith.constant 0 : i32
    %c0_i32_0 = arith.constant 0 : i32
    %c0_i32_1 = arith.constant 0 : i32
    return %c0_i32, %c0_i32_0 : i32, i32
  }
  func.func @transform_11(%arg0: i32, %arg1: i32) -> (i32, i32) {
    %c0_i32 = arith.constant 0 : i32
    %c0_i32_0 = arith.constant 0 : i32
    %c0_i32_1 = arith.constant 0 : i32
    return %c0_i32, %c0_i32_0 : i32, i32
  }
  func.func @transform_12(%arg0: i32, %arg1: i32) -> (i32, i32) {
    %c0_i32 = arith.constant 0 : i32
    %c0_i32_0 = arith.constant 0 : i32
    %c0_i32_1 = arith.constant 0 : i32
    return %c0_i32, %c0_i32_0 : i32, i32
  }
  func.func @transform_13(%arg0: i32, %arg1: i32) -> (i32, i32, i32) {
    %c0_i32 = arith.constant 0 : i32
    %c0_i32_0 = arith.constant 0 : i32
    return %arg0, %arg1, %c0_i32 : i32, i32, i32
  }
}

</mosaic_0001>

<llo_original>
// kernel: tpu_custom_call.1
$region0: #{tpu_custom_call.1}
  #allocation0 [shape = 'u32[]', space=smem, size = 0x4, offset = 0x4, fixed_abs, tag = 'smem constant byte address 0x4 - core index']
  #allocation1 [shape = 'u32[72,128]{1,0:T(1,128)}', space=vmem, size = 0x9000, scoped, tag = 'internal scratch']
  #allocation2 [shape = 'f32[8,32]{1,0:T(8,128)}', space=vmem, size = 0x1000, scoped, tag = 'scratch operand']
  %s0 = inlined_call_operand.vmem [shape: f32[2,8,32], index: 0, kind: input, shape index: {}]
  %s1 = inlined_call_operand.vmem [shape: f32[2,8,32], index: 1, kind: input, shape index: {}]
  %s2 = inlined_call_operand.hbm [shape: f32[2,8,32], index: 2, kind: input, shape index: {}]
  %s3 = inlined_call_operand.hbm [shape: f32[2,8,32], index: 3, kind: input, shape index: {}]
  %s4 = inlined_call_operand.vmem [shape: f32[2,1,8], index: 4, kind: input, shape index: {}]
  %s5 = inlined_call_operand.vmem [shape: f32[32,32], index: 5, kind: input, shape index: {}]
  %s6 = inlined_call_operand.vmem [shape: f32[1,32], index: 6, kind: input, shape index: {}]
  %s7 = inlined_call_operand.vmem [shape: f32[1,32], index: 7, kind: input, shape index: {}]
  %s8 = inlined_call_operand.vmem [shape: f32[1,32], index: 8, kind: input, shape index: {}]
  %s9 = inlined_call_operand.vmem [shape: f32[32,64], index: 9, kind: input, shape index: {}]
  %s10 = inlined_call_operand.vmem [shape: f32[1,64], index: 10, kind: input, shape index: {}]
  %s11 = inlined_call_operand.vmem [shape: f32[64,32], index: 11, kind: input, shape index: {}]
  %s12 = inlined_call_operand.vmem [shape: f32[1,32], index: 12, kind: input, shape index: {}]
  %s13 = inlined_call_operand.hbm [shape: f32[2,8,32], index: 13, kind: output, shape index: {}]
  %s14 = sld [smem:[#allocation0]]
  $region93: #{tpu_custom_call.1} parent=0
    _
  %s16 = ssub.s32 1, %s14
  %s17 = scalar_select 0, %s16, %s14
  $region1: #{tpu_custom_call.1} parent=0
    #allocation3 [shape = 'u8[8192]{0}', space=vmem, size = 0x2000, scoped, tag = 'input window, operand 2']
    #allocation4 [shape = 's32[2]{0}', space=sflag, size = 0x8, scoped, tag = 'scoped memory for tpu_custom_call.1']
    #allocation5 [shape = 's32[2]{0}', space=sflag, size = 0x8, scoped, tag = 'scoped memory for tpu_custom_call.1']
    #allocation6 [shape = 'u8[8192]{0}', space=vmem, size = 0x2000, scoped, tag = 'input window, operand 3']
    #allocation7 [shape = 's32[2]{0}', space=sflag, size = 0x8, scoped, tag = 'scoped memory for tpu_custom_call.1']
    #allocation8 [shape = 'u8[8192]{0}', space=vmem, size = 0x2000, scoped, tag = 'output window, operand 0']
    %18 = vsyncpa [#allocation4], 0
    %s19 = scalar_lea.sflag [#allocation4], 1
    %20 = vsyncpa %s19, 0
    %21 = vsyncpa [#allocation7], 0
    %s22 = scalar_lea.sflag [#allocation7], 1
    %23 = vsyncpa %s22, 0
    %24 = vsyncpa [#allocation5], 0
    %s25 = scalar_lea.sflag [#allocation5], 1
    %26 = vsyncpa %s25, 0
    loop: start=0, step=1, limit=4
    $region2: #{tpu_custom_call.1} parent=1 // loop_pre_header
      _
    $region3: #{tpu_custom_call.1} parent=1 // loop_header
      %s28 = sphi 0, %s32
      %p29 = scmp.ge.s32.totalorder %s28, 4
      %s35 = sphi 0, %s47
      %s36 = sphi 0, %s43
      %s37 = sphi 0, %s35
      %s38 = sphi 0, %s36
      %s39 = sphi 0, %s37
      %s40 = sphi 0, %s38
      %s52 = sphi 0, %s54
      %s55 = sphi 0, %s52
      %s56 = sphi 0, %s55
      %s72 = sphi 0, %s56
      %s80 = sphi 0, %s82
      %s83 = sphi 0, %s80
      %s84 = sphi 0, %s83
      %s100 = sphi 0, %s84
      %s106 = sphi 0, %s108
      %s109 = sphi 0, %s106
      %s110 = sphi 0, %s109
      %s126 = sphi 0, %s110
      %s132 = sphi 0, %s134
      %s135 = sphi 0, %s132
      %s136 = sphi 0, %s135
      %s152 = sphi 0, %s136
      %s158 = sphi 0, %s160
      %s161 = sphi 0, %s158
      %s162 = sphi 0, %s161
      %s178 = sphi 0, %s162
      %s182 = sphi 0, %s182
      %s184 = sphi 0, %s182
      %s185 = sphi 0, %s184
      %s199 = sphi 0, %s185
      %s203 = sphi 0, %s203
      %s205 = sphi 0, %s203
      %s206 = sphi 0, %s205
      %s220 = sphi 0, %s206
      %s224 = sphi 0, %s224
      %s226 = sphi 0, %s224
      %s227 = sphi 0, %s226
      %s241 = sphi 0, %s227
      %s245 = sphi 0, %s245
      %s247 = sphi 0, %s245
      %s248 = sphi 0, %s247
      %s262 = sphi 0, %s248
      %s266 = sphi 0, %s266
      %s268 = sphi 0, %s266
      %s269 = sphi 0, %s268
      %s283 = sphi 0, %s269
      %s287 = sphi 0, %s287
      %s289 = sphi 0, %s287
      %s290 = sphi 0, %s289
      %s304 = sphi 0, %s290
      %s308 = sphi 0, %s308
      %s310 = sphi 0, %s308
      %s311 = sphi 0, %s310
      %s325 = sphi 0, %s311
      %s329 = sphi 0, %s329
      %s331 = sphi 0, %s329
      %s332 = sphi 0, %s331
      %s346 = sphi 0, %s332
      %s354 = sphi 0, %s356
      %s357 = sphi 0, %s354
      %s358 = sphi 0, %s357
      %s374 = sphi 0, %s358
    $region4: #{tpu_custom_call.1} parent=1 // loop_header_branch
      %31 = sbr.rel (%p29) target = $region8
    $region5: #{tpu_custom_call.1} parent=1 // loop_body
      %s33 = ssub.s32 %s28, 1
      %s34 = ssub.s32 %s28, 2
      %s41 = sadd.s32 1, %s36
      %p42 = scmp.ge.s32.totalorder %s41, 1
      %s43 = scalar_select %p42, 0, %s41
      %s44 = sadd.s32 1, %s35
      %s45 = scalar_select %p42, %s44, %s35
      %p46 = scmp.ge.s32.totalorder %s45, 2
      %s47 = scalar_select %p46, 0, %s45
      %s48 = ssub.s32 %s35, %s47
      %s49 = ssub.s32 %s36, %s43
      %s50 = sor.u32 %s48, %s49
      %p51 = scmp.eq.s32.totalorder %s50, 0
      %s53 = sadd.s32 %s52, 1
      %s54 = scalar_select %p51, %s52, %s53
      %p57 = pneg %p51
      %p58 = scmp.eq.s32.totalorder %s28, 1
      %p59 = por %p57, %p58
      %p60 = scmp.ne.s32.totalorder %s52, %s55
      %p61 = scmp.eq.s32.totalorder %s28, 0
      %p62 = por %p60, %p61
      %p63 = scmp.ne.s32.totalorder %s52, %s55
      %p64 = scmp.eq.s32.totalorder %s33, 1
      %p65 = por %p63, %p64
      %p66 = scmp.ne.s32.totalorder %s55, %s56
      %p67 = scmp.eq.s32.totalorder %s33, 0
      %p68 = por %p66, %p67
      %p69 = scmp.ne.s32.totalorder %s55, %s56
      %p70 = scmp.eq.s32.totalorder %s34, 1
      %p71 = por %p69, %p70
      %p73 = scmp.ne.s32.totalorder %s56, %s72
      %p74 = scmp.eq.s32.totalorder %s34, 0
      %p75 = por %p73, %p74
      %s76 = ssub.s32 %s35, %s47
      %s77 = ssub.s32 %s36, %s43
      %s78 = sor.u32 %s76, %s77
      %p79 = scmp.eq.s32.totalorder %s78, 0
      %s81 = sadd.s32 %s80, 1
      %s82 = scalar_select %p79, %s80, %s81
      %p85 = pneg %p79
      %p86 = scmp.eq.s32.totalorder %s28, 1
      %p87 = por %p85, %p86
      %p88 = scmp.ne.s32.totalorder %s80, %s83
      %p89 = scmp.eq.s32.totalorder %s28, 0
      %p90 = por %p88, %p89
      %p91 = scmp.ne.s32.totalorder %s80, %s83
      %p92 = scmp.eq.s32.totalorder %s33, 1
      %p93 = por %p91, %p92
      %p94 = scmp.ne.s32.totalorder %s83, %s84
      %p95 = scmp.eq.s32.totalorder %s33, 0
      %p96 = por %p94, %p95
      %p97 = scmp.ne.s32.totalorder %s83, %s84
      %p98 = scmp.eq.s32.totalorder %s34, 1
      %p99 = por %p97, %p98
      %p101 = scmp.ne.s32.totalorder %s84, %s100
      %p102 = scmp.eq.s32.totalorder %s34, 0
      %p103 = por %p101, %p102
      %s104 = ssub.s32 %s35, %s47
      %p105 = scmp.eq.s32.totalorder %s104, 0
      %s107 = sadd.s32 %s106, 1
      %s108 = scalar_select %p105, %s106, %s107
      %p111 = pneg %p105
      %p112 = scmp.eq.s32.totalorder %s28, 1
      %p113 = por %p111, %p112
      %p114 = scmp.ne.s32.totalorder %s106, %s109
      %p115 = scmp.eq.s32.totalorder %s28, 0
      %p116 = por %p114, %p115
      %p117 = scmp.ne.s32.totalorder %s106, %s109
      %p118 = scmp.eq.s32.totalorder %s33, 1
      %p119 = por %p117, %p118
      %p120 = scmp.ne.s32.totalorder %s109, %s110
      %p121 = scmp.eq.s32.totalorder %s33, 0
      %p122 = por %p120, %p121
      %p123 = scmp.ne.s32.totalorder %s109, %s110
      %p124 = scmp.eq.s32.totalorder %s34, 1
      %p125 = por %p123, %p124
      %p127 = scmp.ne.s32.totalorder %s110, %s126
      %p128 = scmp.eq.s32.totalorder %s34, 0
      %p129 = por %p127, %p128
      %s130 = ssub.s32 %s35, %s47
      %p131 = scmp.eq.s32.totalorder %s130, 0
      %s133 = sadd.s32 %s132, 1
      %s134 = scalar_select %p131, %s132, %s133
      %p137 = pneg %p131
      %p138 = scmp.eq.s32.totalorder %s28, 1
      %p139 = por %p137, %p138
      %p140 = scmp.ne.s32.totalorder %s132, %s135
      %p141 = scmp.eq.s32.totalorder %s28, 0
      %p142 = por %p140, %p141
      %p143 = scmp.ne.s32.totalorder %s132, %s135
      %p144 = scmp.eq.s32.totalorder %s33, 1
      %p145 = por %p143, %p144
      %p146 = scmp.ne.s32.totalorder %s135, %s136
      %p147 = scmp.eq.s32.totalorder %s33, 0
      %p148 = por %p146, %p147
      %p149 = scmp.ne.s32.totalorder %s135, %s136
      %p150 = scmp.eq.s32.totalorder %s34, 1
      %p151 = por %p149, %p150
      %p153 = scmp.ne.s32.totalorder %s136, %s152
      %p154 = scmp.eq.s32.totalorder %s34, 0
      %p155 = por %p153, %p154
      %s156 = ssub.s32 %s35, %s47
      %p157 = scmp.eq.s32.totalorder %s156, 0
      %s159 = sadd.s32 %s158, 1
      %s160 = scalar_select %p157, %s158, %s159
      %p163 = pneg %p157
      %p164 = scmp.eq.s32.totalorder %s28, 1
      %p165 = por %p163, %p164
      %p166 = scmp.ne.s32.totalorder %s158, %s161
      %p167 = scmp.eq.s32.totalorder %s28, 0
      %p168 = por %p166, %p167
      %p169 = scmp.ne.s32.totalorder %s158, %s161
      %p170 = scmp.eq.s32.totalorder %s33, 1
      %p171 = por %p169, %p170
      %p172 = scmp.ne.s32.totalorder %s161, %s162
      %p173 = scmp.eq.s32.totalorder %s33, 0
      %p174 = por %p172, %p173
      %p175 = scmp.ne.s32.totalorder %s161, %s162
      %p176 = scmp.eq.s32.totalorder %s34, 1
      %p177 = por %p175, %p176
      %p179 = scmp.ne.s32.totalorder %s162, %s178
      %p180 = scmp.eq.s32.totalorder %s34, 0
      %p181 = por %p179, %p180
      %s183 = sadd.s32 %s182, 1
      %p186 = scmp.eq.s32.totalorder %s28, 1
      %p187 = scmp.ne.s32.totalorder %s182, %s184
      %p188 = scmp.eq.s32.totalorder %s28, 0
      %p189 = por %p187, %p188
      %p190 = scmp.ne.s32.totalorder %s182, %s184
      %p191 = scmp.eq.s32.totalorder %s33, 1
      %p192 = por %p190, %p191
      %p193 = scmp.ne.s32.totalorder %s184, %s185
      %p194 = scmp.eq.s32.totalorder %s33, 0
      %p195 = por %p193, %p194
      %p196 = scmp.ne.s32.totalorder %s184, %s185
      %p197 = scmp.eq.s32.totalorder %s34, 1
      %p198 = por %p196, %p197
      %p200 = scmp.ne.s32.totalorder %s185, %s199
      %p201 = scmp.eq.s32.totalorder %s34, 0
      %p202 = por %p200, %p201
      %s204 = sadd.s32 %s203, 1
      %p207 = scmp.eq.s32.totalorder %s28, 1
      %p208 = scmp.ne.s32.totalorder %s203, %s205
      %p209 = scmp.eq.s32.totalorder %s28, 0
      %p210 = por %p208, %p209
      %p211 = scmp.ne.s32.totalorder %s203, %s205
      %p212 = scmp.eq.s32.totalorder %s33, 1
      %p213 = por %p211, %p212
      %p214 = scmp.ne.s32.totalorder %s205, %s206
      %p215 = scmp.eq.s32.totalorder %s33, 0
      %p216 = por %p214, %p215
      %p217 = scmp.ne.s32.totalorder %s205, %s206
      %p218 = scmp.eq.s32.totalorder %s34, 1
      %p219 = por %p217, %p218
      %p221 = scmp.ne.s32.totalorder %s206, %s220
      %p222 = scmp.eq.s32.totalorder %s34, 0
      %p223 = por %p221, %p222
      %s225 = sadd.s32 %s224, 1
      %p228 = scmp.eq.s32.totalorder %s28, 1
      %p229 = scmp.ne.s32.totalorder %s224, %s226
      %p230 = scmp.eq.s32.totalorder %s28, 0
      %p231 = por %p229, %p230
      %p232 = scmp.ne.s32.totalorder %s224, %s226
      %p233 = scmp.eq.s32.totalorder %s33, 1
      %p234 = por %p232, %p233
      %p235 = scmp.ne.s32.totalorder %s226, %s227
      %p236 = scmp.eq.s32.totalorder %s33, 0
      %p237 = por %p235, %p236
      %p238 = scmp.ne.s32.totalorder %s226, %s227
      %p239 = scmp.eq.s32.totalorder %s34, 1
      %p240 = por %p238, %p239
      %p242 = scmp.ne.s32.totalorder %s227, %s241
      %p243 = scmp.eq.s32.totalorder %s34, 0
      %p244 = por %p242, %p243
      %s246 = sadd.s32 %s245, 1
      %p249 = scmp.eq.s32.totalorder %s28, 1
      %p250 = scmp.ne.s32.totalorder %s245, %s247
      %p251 = scmp.eq.s32.totalorder %s28, 0
      %p252 = por %p250, %p251
      %p253 = scmp.ne.s32.totalorder %s245, %s247
      %p254 = scmp.eq.s32.totalorder %s33, 1
      %p255 = por %p253, %p254
      %p256 = scmp.ne.s32.totalorder %s247, %s248
      %p257 = scmp.eq.s32.totalorder %s33, 0
      %p258 = por %p256, %p257
      %p259 = scmp.ne.s32.totalorder %s247, %s248
      %p260 = scmp.eq.s32.totalorder %s34, 1
      %p261 = por %p259, %p260
      %p263 = scmp.ne.s32.totalorder %s248, %s262
      %p264 = scmp.eq.s32.totalorder %s34, 0
      %p265 = por %p263, %p264
      %s267 = sadd.s32 %s266, 1
      %p270 = scmp.eq.s32.totalorder %s28, 1
      %p271 = scmp.ne.s32.totalorder %s266, %s268
      %p272 = scmp.eq.s32.totalorder %s28, 0
      %p273 = por %p271, %p272
      %p274 = scmp.ne.s32.totalorder %s266, %s268
      %p275 = scmp.eq.s32.totalorder %s33, 1
      %p276 = por %p274, %p275
      %p277 = scmp.ne.s32.totalorder %s268, %s269
      %p278 = scmp.eq.s32.totalorder %s33, 0
      %p279 = por %p277, %p278
      %p280 = scmp.ne.s32.totalorder %s268, %s269
      %p281 = scmp.eq.s32.totalorder %s34, 1
      %p282 = por %p280, %p281
      %p284 = scmp.ne.s32.totalorder %s269, %s283
      %p285 = scmp.eq.s32.totalorder %s34, 0
      %p286 = por %p284, %p285
      %s288 = sadd.s32 %s287, 1
      %p291 = scmp.eq.s32.totalorder %s28, 1
      %p292 = scmp.ne.s32.totalorder %s287, %s289
      %p293 = scmp.eq.s32.totalorder %s28, 0
      %p294 = por %p292, %p293
      %p295 = scmp.ne.s32.totalorder %s287, %s289
      %p296 = scmp.eq.s32.totalorder %s33, 1
      %p297 = por %p295, %p296
      %p298 = scmp.ne.s32.totalorder %s289, %s290
      %p299 = scmp.eq.s32.totalorder %s33, 0
      %p300 = por %p298, %p299
      %p301 = scmp.ne.s32.totalorder %s289, %s290
      %p302 = scmp.eq.s32.totalorder %s34, 1
      %p303 = por %p301, %p302
      %p305 = scmp.ne.s32.totalorder %s290, %s304
      %p306 = scmp.eq.s32.totalorder %s34, 0
      %p307 = por %p305, %p306
      %s309 = sadd.s32 %s308, 1
      %p312 = scmp.eq.s32.totalorder %s28, 1
      %p313 = scmp.ne.s32.totalorder %s308, %s310
      %p314 = scmp.eq.s32.totalorder %s28, 0
      %p315 = por %p313, %p314
      %p316 = scmp.ne.s32.totalorder %s308, %s310
      %p317 = scmp.eq.s32.totalorder %s33, 1
      %p318 = por %p316, %p317
      %p319 = scmp.ne.s32.totalorder %s310, %s311
      %p320 = scmp.eq.s32.totalorder %s33, 0
      %p321 = por %p319, %p320
      %p322 = scmp.ne.s32.totalorder %s310, %s311
      %p323 = scmp.eq.s32.totalorder %s34, 1
      %p324 = por %p322, %p323
      %p326 = scmp.ne.s32.totalorder %s311, %s325
      %p327 = scmp.eq.s32.totalorder %s34, 0
      %p328 = por %p326, %p327
      %s330 = sadd.s32 %s329, 1
      %p333 = scmp.eq.s32.totalorder %s28, 1
      %p334 = scmp.ne.s32.totalorder %s329, %s331
      %p335 = scmp.eq.s32.totalorder %s28, 0
      %p336 = por %p334, %p335
      %p337 = scmp.ne.s32.totalorder %s329, %s331
      %p338 = scmp.eq.s32.totalorder %s33, 1
      %p339 = por %p337, %p338
      %p340 = scmp.ne.s32.totalorder %s331, %s332
      %p341 = scmp.eq.s32.totalorder %s33, 0
      %p342 = por %p340, %p341
      %p343 = scmp.ne.s32.totalorder %s331, %s332
      %p344 = scmp.eq.s32.totalorder %s34, 1
      %p345 = por %p343, %p344
      %p347 = scmp.ne.s32.totalorder %s332, %s346
      %p348 = scmp.eq.s32.totalorder %s34, 0
      %p349 = por %p347, %p348
      %s350 = ssub.s32 %s35, %s47
      %s351 = ssub.s32 %s36, %s43
      %s352 = sor.u32 %s350, %s351
      %p353 = scmp.eq.s32.totalorder %s352, 0
      %s355 = sadd.s32 %s354, 1
      %s356 = scalar_select %p353, %s354, %s355
      %p359 = pneg %p353
      %p360 = scmp.eq.s32.totalorder %s28, 1
      %p361 = por %p359, %p360
      %p362 = scmp.ne.s32.totalorder %s354, %s357
      %p363 = scmp.eq.s32.totalorder %s28, 0
      %p364 = por %p362, %p363
      %p365 = scmp.ne.s32.totalorder %s354, %s357
      %p366 = scmp.eq.s32.totalorder %s33, 1
      %p367 = por %p365, %p366
      %p368 = scmp.ne.s32.totalorder %s357, %s358
      %p369 = scmp.eq.s32.totalorder %s33, 0
      %p370 = por %p368, %p369
      %p371 = scmp.ne.s32.totalorder %s357, %s358
      %p372 = scmp.eq.s32.totalorder %s34, 1
      %p373 = por %p371, %p372
      %p375 = scmp.ne.s32.totalorder %s358, %s374
      %p376 = scmp.eq.s32.totalorder %s34, 0
      %p377 = por %p375, %p376
      %p378 = scmp.le.s32.totalorder 1, %s28
      %p379 = scmp.lt.s32.totalorder %s28, 3
      %p380 = pnand %p378, %p379
      %p381 = pneg %p380
      // Predicated region
      $region9: #{tpu_custom_call.1} parent=5 // pred_check
        _
      $region10: #{tpu_custom_call.1} parent=5 // pred_check_branch
        %383 = sbr.rel (%p380) target = $region12
      $region11: #{tpu_custom_call.1} parent=5 // pred_region
        %s384 = ssub.s32 %s28, 1
        // Predicated region
        $region13: #{tpu_custom_call.1} parent=11 // pred_check
          %p385 = pneg %p195
        $region14: #{tpu_custom_call.1} parent=11 // pred_check_branch
          %387 = sbr.rel (%p385) target = $region16
        $region15: #{tpu_custom_call.1} parent=11 // pred_region
          _
        $region16: #{tpu_custom_call.1} parent=11 // pred_fallthru
          _
        // Predicated region
        $region17: #{tpu_custom_call.1} parent=11 // pred_check
          %p388 = pneg %p216
        $region18: #{tpu_custom_call.1} parent=11 // pred_check_branch
          %390 = sbr.rel (%p388) target = $region20
        $region19: #{tpu_custom_call.1} parent=11 // pred_region
          _
        $region20: #{tpu_custom_call.1} parent=11 // pred_fallthru
          _
        // Predicated region
        $region21: #{tpu_custom_call.1} parent=11 // pred_check
          %p391 = pneg %p237
        $region22: #{tpu_custom_call.1} parent=11 // pred_check_branch
          %393 = sbr.rel (%p391) target = $region24
        $region23: #{tpu_custom_call.1} parent=11 // pred_region
          _
        $region24: #{tpu_custom_call.1} parent=11 // pred_fallthru
          _
        // Predicated region
        $region25: #{tpu_custom_call.1} parent=11 // pred_check
          %p394 = pneg %p258
        $region26: #{tpu_custom_call.1} parent=11 // pred_check_branch
          %396 = sbr.rel (%p394) target = $region28
        $region27: #{tpu_custom_call.1} parent=11 // pred_region
          _
        $region28: #{tpu_custom_call.1} parent=11 // pred_fallthru
          _
        // Predicated region
        $region29: #{tpu_custom_call.1} parent=11 // pred_check
          %p397 = pneg %p279
        $region30: #{tpu_custom_call.1} parent=11 // pred_check_branch
          %399 = sbr.rel (%p397) target = $region32
        $region31: #{tpu_custom_call.1} parent=11 // pred_region
          _
        $region32: #{tpu_custom_call.1} parent=11 // pred_fallthru
          _
        // Predicated region
        $region33: #{tpu_custom_call.1} parent=11 // pred_check
          %p400 = pneg %p300
        $region34: #{tpu_custom_call.1} parent=11 // pred_check_branch
          %402 = sbr.rel (%p400) target = $region36
        $region35: #{tpu_custom_call.1} parent=11 // pred_region
          _
        $region36: #{tpu_custom_call.1} parent=11 // pred_fallthru
          _
        // Predicated region
        $region37: #{tpu_custom_call.1} parent=11 // pred_check
          %p403 = pneg %p321
        $region38: #{tpu_custom_call.1} parent=11 // pred_check_branch
          %405 = sbr.rel (%p403) target = $region40
        $region39: #{tpu_custom_call.1} parent=11 // pred_region
          _
        $region40: #{tpu_custom_call.1} parent=11 // pred_fallthru
          _
        // Predicated region
        $region41: #{tpu_custom_call.1} parent=11 // pred_check
          %p406 = pneg %p342
        $region42: #{tpu_custom_call.1} parent=11 // pred_check_branch
          %408 = sbr.rel (%p406) target = $region44
        $region43: #{tpu_custom_call.1} parent=11 // pred_region
          _
        $region44: #{tpu_custom_call.1} parent=11 // pred_fallthru
          _
      $region12: #{tpu_custom_call.1} parent=5 // pred_fallthru
        _
      %p409 = scmp.lt.s32.totalorder %s28, 2
      // Predicated region
      $region45: #{tpu_custom_call.1} parent=5 // pred_check
        %p410 = pneg %p409
      $region46: #{tpu_custom_call.1} parent=5 // pred_check_branch
        %412 = sbr.rel (%p410) target = $region48
      $region47: #{tpu_custom_call.1} parent=5 // pred_region
        // Predicated region
        $region49: #{tpu_custom_call.1} parent=47 // pred_check
          %p413 = pneg %p62
        $region50: #{tpu_custom_call.1} parent=47 // pred_check_branch
          %415 = sbr.rel (%p413) target = $region52
        $region51: #{tpu_custom_call.1} parent=47 // pred_region
          %p416 = scmp.lt.s32.totalorder %s35, 1
          %s417 = scalar_select %p416, %s35, 1
          %p418 = scmp.lt.s32.totalorder %s36, 0
          %s419 = scalar_select %p418, %s36, 0
          %s420 = sadd.s32 %s419, %s417
          %s421 = smul.addr %s420, 8
          %s422 = scalar_lea.vmem %s0, %s421
        $region52: #{tpu_custom_call.1} parent=47 // pred_fallthru
          _
        // Predicated region
        $region53: #{tpu_custom_call.1} parent=47 // pred_check
          %p423 = pneg %p90
        $region54: #{tpu_custom_call.1} parent=47 // pred_check_branch
          %425 = sbr.rel (%p423) target = $region56
        $region55: #{tpu_custom_call.1} parent=47 // pred_region
          %p426 = scmp.lt.s32.totalorder %s35, 1
          %s427 = scalar_select %p426, %s35, 1
          %p428 = scmp.lt.s32.totalorder %s36, 0
          %s429 = scalar_select %p428, %s36, 0
          %s430 = sadd.s32 %s429, %s427
          %s431 = smul.addr %s430, 8
          %s432 = scalar_lea.vmem %s1, %s431
        $region56: #{tpu_custom_call.1} parent=47 // pred_fallthru
          _
        // Predicated region
        $region57: #{tpu_custom_call.1} parent=47 // pred_check
          %p433 = pneg %p116
        $region58: #{tpu_custom_call.1} parent=47 // pred_check_branch
          %435 = sbr.rel (%p433) target = $region60
        $region59: #{tpu_custom_call.1} parent=47 // pred_region
          %s436 = sand.u32 %s106, 1
          %s437 = scalar_lea.sflag [#allocation4], %s436
          %s438 = sand.u32 %s106, 1
          %s439 = smul.addr %s438, 8
          %s440 = scalar_lea.vmem [#allocation3], %s439
          %442 = vsyncadd %s437, 0
          %s443 = smul.addr %s35, 8
          %s444 = scalar_lea.hbm %s2, %s443
          %s446 = sshll.u32 %s444, 4
          %s447 = int_to_ptr.hbm [resolvable:$true] %s446
          %s448 = sshll.u32 %s440, 4
          %s449 = int_to_ptr.vmem [resolvable:$true] %s448
          %451 = dma.hbm_to_vmem [thread:$0]  %s447, 128, %s449, %s437
        $region60: #{tpu_custom_call.1} parent=47 // pred_fallthru
          _
        // Predicated region
        $region61: #{tpu_custom_call.1} parent=47 // pred_check
          %p452 = pneg %p142
        $region62: #{tpu_custom_call.1} parent=47 // pred_check_branch
          %454 = sbr.rel (%p452) target = $region64
        $region63: #{tpu_custom_call.1} parent=47 // pred_region
          %s455 = sand.u32 %s132, 1
          %s456 = scalar_lea.sflag [#allocation7], %s455
          %s457 = sand.u32 %s132, 1
          %s458 = smul.addr %s457, 8
          %s459 = scalar_lea.vmem [#allocation6], %s458
          %461 = vsyncadd %s456, 0
          %s462 = smul.addr %s35, 8
          %s463 = scalar_lea.hbm %s3, %s462
          %s465 = sshll.u32 %s463, 4
          %s466 = int_to_ptr.hbm [resolvable:$true] %s465
          %s467 = sshll.u32 %s459, 4
          %s468 = int_to_ptr.vmem [resolvable:$true] %s467
          %470 = dma.hbm_to_vmem [thread:$0]  %s466, 128, %s468, %s456
        $region64: #{tpu_custom_call.1} parent=47 // pred_fallthru
          _
        // Predicated region
        $region65: #{tpu_custom_call.1} parent=47 // pred_check
          %p471 = pneg %p168
        $region66: #{tpu_custom_call.1} parent=47 // pred_check_branch
          %473 = sbr.rel (%p471) target = $region68
        $region67: #{tpu_custom_call.1} parent=47 // pred_region
          %p474 = scmp.lt.s32.totalorder %s35, 1
          %s475 = scalar_select %p474, %s35, 1
          %s476 = scalar_lea.vmem %s4, %s475
        $region68: #{tpu_custom_call.1} parent=47 // pred_fallthru
          _
      $region48: #{tpu_custom_call.1} parent=5 // pred_fallthru
        _
      %p477 = scmp.le.s32.totalorder 1, %s28
      %p478 = scmp.lt.s32.totalorder %s28, 3
      %p479 = pnand %p477, %p478
      %p480 = pneg %p479
      // Predicated region
      $region69: #{tpu_custom_call.1} parent=5 // pred_check
        _
      $region70: #{tpu_custom_call.1} parent=5 // pred_check_branch
        %482 = sbr.rel (%p479) target = $region72
      $region71: #{tpu_custom_call.1} parent=5 // pred_region
        %s483 = ssub.s32 %s28, 1
        %s484 = sand.u32 %s109, 1
        %s485 = scalar_lea.sflag [#allocation4], %s484
        %s486 = sand.u32 %s109, 1
        %s487 = smul.addr %s486, 8
        %s488 = scalar_lea.vmem [#allocation3], %s487
        // Predicated region
        $region73: #{tpu_custom_call.1} parent=71 // pred_check
          %p489 = pneg %p122
        $region74: #{tpu_custom_call.1} parent=71 // pred_check_branch
          %491 = sbr.rel (%p489) target = $region76
        $region75: #{tpu_custom_call.1} parent=71 // pred_region
          %493 = dma.done %s485, 128
        $region76: #{tpu_custom_call.1} parent=71 // pred_fallthru
          _
        %s494 = sand.u32 %s135, 1
        %s495 = scalar_lea.sflag [#allocation7], %s494
        %s496 = sand.u32 %s135, 1
        %s497 = smul.addr %s496, 8
        %s498 = scalar_lea.vmem [#allocation6], %s497
        // Predicated region
        $region77: #{tpu_custom_call.1} parent=71 // pred_check
          %p499 = pneg %p148
        $region78: #{tpu_custom_call.1} parent=71 // pred_check_branch
          %501 = sbr.rel (%p499) target = $region80
        $region79: #{tpu_custom_call.1} parent=71 // pred_region
          %503 = dma.done %s495, 128
        $region80: #{tpu_custom_call.1} parent=71 // pred_fallthru
          _
        %p504 = scmp.lt.s32.totalorder %s37, 1
        %s505 = scalar_select %p504, %s37, 1
        %p506 = scmp.lt.s32.totalorder %s38, 0
        %s507 = scalar_select %p506, %s38, 0
        %s508 = sadd.s32 %s507, %s505
        %s509 = smul.addr %s508, 8
        %s510 = scalar_lea.vmem %s0, %s509
        %p511 = pneg %p68
        %p512 = pneg %p65
        %p513 = scmp.lt.s32.totalorder %s37, 1
        %s514 = scalar_select %p513, %s37, 1
        %p515 = scmp.lt.s32.totalorder %s38, 0
        %s516 = scalar_select %p515, %s38, 0
        %s517 = sadd.s32 %s516, %s514
        %s518 = smul.addr %s517, 8
        %s519 = scalar_lea.vmem %s1, %s518
        %p520 = pneg %p96
        %p521 = pneg %p93
        %s522 = sand.u32 %s109, 1
        %s523 = scalar_lea.sflag [#allocation4], %s522
        %s524 = sand.u32 %s109, 1
        %s525 = smul.addr %s524, 8
        %s526 = scalar_lea.vmem [#allocation3], %s525
        %p527 = pneg %p122
        %p528 = pneg %p119
        %s529 = sand.u32 %s135, 1
        %s530 = scalar_lea.sflag [#allocation7], %s529
        %s531 = sand.u32 %s135, 1
        %s532 = smul.addr %s531, 8
        %s533 = scalar_lea.vmem [#allocation6], %s532
        %p534 = pneg %p148
        %p535 = pneg %p145
        %p536 = scmp.lt.s32.totalorder %s37, 1
        %s537 = scalar_select %p536, %s37, 1
        %s538 = scalar_lea.vmem %s4, %s537
        %p539 = pneg %p174
        %p540 = pneg %p171
        %p541 = pneg %p195
        %p542 = pneg %p192
        %p543 = pneg %p216
        %p544 = pneg %p213
        %p545 = pneg %p237
        %p546 = pneg %p234
        %p547 = pneg %p258
        %p548 = pneg %p255
        %p549 = pneg %p279
        %p550 = pneg %p276
        %p551 = pneg %p300
        %p552 = pneg %p297
        %p553 = pneg %p321
        %p554 = pneg %p318
        %p555 = pneg %p342
        %p556 = pneg %p339
        %p557 = pneg %p370
        %p558 = pneg %p367
        %s559 = sand.u32 %s357, 1
        %s560 = scalar_lea.sflag [#allocation5], %s559
        %s561 = sand.u32 %s357, 1
        %s562 = smul.addr %s561, 8
        %s563 = scalar_lea.vmem [#allocation8], %s562
        %p564 = scmp.lt.s32.totalorder %s37, 1
        %s565 = scalar_select %p564, %s37, 1
        %p566 = scmp.lt.s32.totalorder %s38, 0
        %s567 = scalar_select %p566, %s38, 0
        %s568 = sadd.s32 %s567, %s565
        %s569 = smul.addr %s568, 8
        %s570 = scalar_lea.vmem %s0, %s569
        %p571 = scmp.lt.s32.totalorder %s37, 1
        %s572 = scalar_select %p571, %s37, 1
        %p573 = scmp.lt.s32.totalorder %s38, 0
        %s574 = scalar_select %p573, %s38, 0
        %s575 = sadd.s32 %s574, %s572
        %s576 = smul.addr %s575, 8
        %s577 = scalar_lea.vmem %s1, %s576
        %p578 = scmp.lt.s32.totalorder %s37, 1
        %s579 = scalar_select %p578, %s37, 1
        %s580 = scalar_lea.vmem %s4, %s579
        %v581 = vld [vmem:[%s570] sm:$0xff]
        %v582 = vld [vmem:[%s577] sm:$0xff]
        %v583 = vld [vmem:[%s488] sm:$0xff]
        %v584 = vld [vmem:[%s498] sm:$0xff]
        %v585 = vld [vmem:[%s580] sm:$0x1]
        %v587 = vperm.slane %v585, 0
        %vm589 = vcmask 64512
        %v591 = vsel %vm589, %v582, 0
        %v594 = vsel %vm589, %v583, 0
        %596 = vmatpush.xpose.msra.mxu0 0.0
        %597 = vmatpush.xpose.msra.mxu0 0.0
        %598 = vmatpush.xpose.msra.mxu0 0.0
        %599 = vmatpush.xpose.msra.mxu0 0.0
        %600 = vmatpush.xpose.msra.mxu0 0.0
        %601 = vmatpush.xpose.msra.mxu0 0.0
        %602 = vmatpush.xpose.msra.mxu0 0.0
        %603 = vmatpush.xpose.msra.mxu0 0.0
        %604 = vmatpush.xpose.msra.mxu0 0.0
        %605 = vmatpush.xpose.msra.mxu0 0.0
        %606 = vmatpush.xpose.msra.mxu0 0.0
        %607 = vmatpush.xpose.msra.mxu0 0.0
        %608 = vmatpush.xpose.msra.mxu0 0.0
        %609 = vmatpush.xpose.msra.mxu0 0.0
        %610 = vmatpush.xpose.msra.mxu0 0.0
        %611 = vmatpush.xpose.msra.mxu0 %v594
        %612 = vmatmul.f32.gmra.mxu0 %v591
        %v613 = vpop.f32.mrf.mxu0
        %v614 = vadd.f32 %v587, %v613
        %615 = vdwg.mxu0
        %v616 = vsel %vm589, %v614, -inf
        %617 = vmax.xlane.f32.xlu0 %v616
        %v618 = vpop.xlane.xlu0 %617
        %v619 = vsub.f32 %v614, %v618
        %v620 = vmul.f32 %v619, 1.442695
        %v621 = vpow.pop %v620
        %v622 = vsel %vm589, %v621, 0.0
        %623 = vadd.xlane.f32.xlu0 %v622
        %v624 = vpop.xlane.xlu0 %623
        %v625 = vrcp.pop %v624
        %v627 = vsel %vm589, %v621, 0
        %629 = vmatpush.msra.mxu0 0.0
        %630 = vmatpush.msra.mxu0 0.0
        %631 = vmatpush.msra.mxu0 0.0
        %632 = vmatpush.msra.mxu0 0.0
        %633 = vmatpush.msra.mxu0 0.0
        %634 = vmatpush.msra.mxu0 0.0
        %635 = vmatpush.msra.mxu0 0.0
        %636 = vmatpush.msra.mxu0 0.0
        %637 = vmatpush.msra.mxu0 0.0
        %638 = vmatpush.msra.mxu0 0.0
        %639 = vmatpush.msra.mxu0 0.0
        %640 = vmatpush.msra.mxu0 0.0
        %641 = vmatpush.msra.mxu0 0.0
        %642 = vmatpush.msra.mxu0 0.0
        %643 = vmatpush.msra.mxu0 0.0
        %644 = vmatpush.msra.mxu0 %v584
        %645 = vmatmul.f32.gmra.mxu0 %v627
        %v646 = vpop.f32.mrf.mxu0
        %v647 = vadd.f32 0.0, %v646
        %648 = vdwg.mxu0
        %v649 = vmul.f32 %v647, %v625
        %650 = vst.msk [vmem:[#allocation2] sm:$0xff] %vm589, %v649
        %651 = vrot.lane.b32.xlu0 %v582, 120
        %v652 = vpop.permute.xlu0 %651
        %653 = vrot.lane.b32.xlu0 %v583, 120
        %v654 = vpop.permute.xlu0 %653
        %v655 = vsel %vm589, %v652, 0
        %v657 = vsel %vm589, %v654, 0
        %659 = vmatpush.xpose.msra.mxu0 0.0
        %660 = vmatpush.xpose.msra.mxu0 0.0
        %661 = vmatpush.xpose.msra.mxu0 0.0
        %662 = vmatpush.xpose.msra.mxu0 0.0
        %663 = vmatpush.xpose.msra.mxu0 0.0
        %664 = vmatpush.xpose.msra.mxu0 0.0
        %665 = vmatpush.xpose.msra.mxu0 0.0
        %666 = vmatpush.xpose.msra.mxu0 0.0
        %667 = vmatpush.xpose.msra.mxu0 0.0
        %668 = vmatpush.xpose.msra.mxu0 0.0
        %669 = vmatpush.xpose.msra.mxu0 0.0
        %670 = vmatpush.xpose.msra.mxu0 0.0
        %671 = vmatpush.xpose.msra.mxu0 0.0
        %672 = vmatpush.xpose.msra.mxu0 0.0
        %673 = vmatpush.xpose.msra.mxu0 0.0
        %674 = vmatpush.xpose.msra.mxu0 %v657
        %675 = vmatmul.f32.gmra.mxu0 %v655
        %v676 = vpop.f32.mrf.mxu0
        %v677 = vadd.f32 %v587, %v676
        %678 = vdwg.mxu0
        %v679 = vsel %vm589, %v677, -inf
        %680 = vmax.xlane.f32.xlu0 %v679
        %v681 = vpop.xlane.xlu0 %680
        %v682 = vsub.f32 %v677, %v681
        %v683 = vmul.f32 %v682, 1.442695
        %v684 = vpow.pop %v683
        %v685 = vsel %vm589, %v684, 0.0
        %686 = vadd.xlane.f32.xlu0 %v685
        %v687 = vpop.xlane.xlu0 %686
        %v688 = vrcp.pop %v687
        %690 = vrot.lane.b32.xlu0 %v584, 120
        %v691 = vpop.permute.xlu0 %690
        %v694 = vsel %vm589, %v684, 0
        %696 = vmatpush.msra.mxu0 0.0
        %697 = vmatpush.msra.mxu0 0.0
        %698 = vmatpush.msra.mxu0 0.0
        %699 = vmatpush.msra.mxu0 0.0
        %700 = vmatpush.msra.mxu0 0.0
        %701 = vmatpush.msra.mxu0 0.0
        %702 = vmatpush.msra.mxu0 0.0
        %703 = vmatpush.msra.mxu0 0.0
        %704 = vmatpush.msra.mxu0 0.0
        %705 = vmatpush.msra.mxu0 0.0
        %706 = vmatpush.msra.mxu0 0.0
        %707 = vmatpush.msra.mxu0 0.0
        %708 = vmatpush.msra.mxu0 0.0
        %709 = vmatpush.msra.mxu0 0.0
        %710 = vmatpush.msra.mxu0 0.0
        %711 = vmatpush.msra.mxu0 %v691
        %712 = vmatmul.f32.gmra.mxu0 %v694
        %v713 = vpop.f32.mrf.mxu0
        %v714 = vadd.f32 0.0, %v713
        %715 = vdwg.mxu0
        %v716 = vmul.f32 %v714, %v688
        %718 = vrot.lane.b32.xlu0 %v716, 8
        %v719 = vpop.permute.xlu0 %718
        %vm721 = vcmask 130112
        %722 = vst.msk [vmem:[#allocation2] sm:$0xff] %vm721, %v719
        %723 = vrot.lane.b32.xlu0 %v582, 112
        %v724 = vpop.permute.xlu0 %723
        %725 = vrot.lane.b32.xlu0 %v583, 112
        %v726 = vpop.permute.xlu0 %725
        %v727 = vsel %vm589, %v724, 0
        %v729 = vsel %vm589, %v726, 0
        %731 = vmatpush.xpose.msra.mxu0 0.0
        %732 = vmatpush.xpose.msra.mxu0 0.0
        %733 = vmatpush.xpose.msra.mxu0 0.0
        %734 = vmatpush.xpose.msra.mxu0 0.0
        %735 = vmatpush.xpose.msra.mxu0 0.0
        %736 = vmatpush.xpose.msra.mxu0 0.0
        %737 = vmatpush.xpose.msra.mxu0 0.0
        %738 = vmatpush.xpose.msra.mxu0 0.0
        %739 = vmatpush.xpose.msra.mxu0 0.0
        %740 = vmatpush.xpose.msra.mxu0 0.0
        %741 = vmatpush.xpose.msra.mxu0 0.0
        %742 = vmatpush.xpose.msra.mxu0 0.0
        %743 = vmatpush.xpose.msra.mxu0 0.0
        %744 = vmatpush.xpose.msra.mxu0 0.0
        %745 = vmatpush.xpose.msra.mxu0 0.0
        %746 = vmatpush.xpose.msra.mxu0 %v729
        %747 = vmatmul.f32.gmra.mxu0 %v727
        %v748 = vpop.f32.mrf.mxu0
        %v749 = vadd.f32 %v587, %v748
        %750 = vdwg.mxu0
        %v751 = vsel %vm589, %v749, -inf
        %752 = vmax.xlane.f32.xlu0 %v751
        %v753 = vpop.xlane.xlu0 %752
        %v754 = vsub.f32 %v749, %v753
        %v755 = vmul.f32 %v754, 1.442695
        %v756 = vpow.pop %v755
        %v757 = vsel %vm589, %v756, 0.0
        %758 = vadd.xlane.f32.xlu0 %v757
        %v759 = vpop.xlane.xlu0 %758
        %v760 = vrcp.pop %v759
        %761 = vrot.lane.b32.xlu0 %v584, 112
        %v762 = vpop.permute.xlu0 %761
        %v765 = vsel %vm589, %v756, 0
        %767 = vmatpush.msra.mxu0 0.0
        %768 = vmatpush.msra.mxu0 0.0
        %769 = vmatpush.msra.mxu0 0.0
        %770 = vmatpush.msra.mxu0 0.0
        %771 = vmatpush.msra.mxu0 0.0
        %772 = vmatpush.msra.mxu0 0.0
        %773 = vmatpush.msra.mxu0 0.0
        %774 = vmatpush.msra.mxu0 0.0
        %775 = vmatpush.msra.mxu0 0.0
        %776 = vmatpush.msra.mxu0 0.0
        %777 = vmatpush.msra.mxu0 0.0
        %778 = vmatpush.msra.mxu0 0.0
        %779 = vmatpush.msra.mxu0 0.0
        %780 = vmatpush.msra.mxu0 0.0
        %781 = vmatpush.msra.mxu0 0.0
        %782 = vmatpush.msra.mxu0 %v762
        %783 = vmatmul.f32.gmra.mxu0 %v765
        %v784 = vpop.f32.mrf.mxu0
        %v785 = vadd.f32 0.0, %v784
        %786 = vdwg.mxu0
        %v787 = vmul.f32 %v785, %v760
        %789 = vrot.lane.b32.xlu0 %v787, 16
        %v790 = vpop.permute.xlu0 %789
        %vm792 = vcmask 195712
        %793 = vst.msk [vmem:[#allocation2] sm:$0xff] %vm792, %v790
        %794 = vrot.lane.b32.xlu0 %v582, 104
        %v795 = vpop.permute.xlu0 %794
        %796 = vrot.lane.b32.xlu0 %v583, 104
        %v797 = vpop.permute.xlu0 %796
        %v798 = vsel %vm589, %v795, 0
        %v800 = vsel %vm589, %v797, 0
        %802 = vmatpush.xpose.msra.mxu0 0.0
        %803 = vmatpush.xpose.msra.mxu0 0.0
        %804 = vmatpush.xpose.msra.mxu0 0.0
        %805 = vmatpush.xpose.msra.mxu0 0.0
        %806 = vmatpush.xpose.msra.mxu0 0.0
        %807 = vmatpush.xpose.msra.mxu0 0.0
        %808 = vmatpush.xpose.msra.mxu0 0.0
        %809 = vmatpush.xpose.msra.mxu0 0.0
        %810 = vmatpush.xpose.msra.mxu0 0.0
        %811 = vmatpush.xpose.msra.mxu0 0.0
        %812 = vmatpush.xpose.msra.mxu0 0.0
        %813 = vmatpush.xpose.msra.mxu0 0.0
        %814 = vmatpush.xpose.msra.mxu0 0.0
        %815 = vmatpush.xpose.msra.mxu0 0.0
        %816 = vmatpush.xpose.msra.mxu0 0.0
        %817 = vmatpush.xpose.msra.mxu0 %v800
        %818 = vmatmul.f32.gmra.mxu0 %v798
        %v819 = vpop.f32.mrf.mxu0
        %v820 = vadd.f32 %v587, %v819
        %821 = vdwg.mxu0
        %v822 = vsel %vm589, %v820, -inf
        %823 = vmax.xlane.f32.xlu0 %v822
        %v824 = vpop.xlane.xlu0 %823
        %v825 = vsub.f32 %v820, %v824
        %v826 = vmul.f32 %v825, 1.442695
        %v827 = vpow.pop %v826
        %v828 = vsel %vm589, %v827, 0.0
        %829 = vadd.xlane.f32.xlu0 %v828
        %v830 = vpop.xlane.xlu0 %829
        %v831 = vrcp.pop %v830
        %832 = vrot.lane.b32.xlu0 %v584, 104
        %v833 = vpop.permute.xlu0 %832
        %v836 = vsel %vm589, %v827, 0
        %838 = vmatpush.msra.mxu0 0.0
        %839 = vmatpush.msra.mxu0 0.0
        %840 = vmatpush.msra.mxu0 0.0
        %841 = vmatpush.msra.mxu0 0.0
        %842 = vmatpush.msra.mxu0 0.0
        %843 = vmatpush.msra.mxu0 0.0
        %844 = vmatpush.msra.mxu0 0.0
        %845 = vmatpush.msra.mxu0 0.0
        %846 = vmatpush.msra.mxu0 0.0
        %847 = vmatpush.msra.mxu0 0.0
        %848 = vmatpush.msra.mxu0 0.0
        %849 = vmatpush.msra.mxu0 0.0
        %850 = vmatpush.msra.mxu0 0.0
        %851 = vmatpush.msra.mxu0 0.0
        %852 = vmatpush.msra.mxu0 0.0
        %853 = vmatpush.msra.mxu0 %v833
        %854 = vmatmul.f32.gmra.mxu0 %v836
        %v855 = vpop.f32.mrf.mxu0
        %v856 = vadd.f32 0.0, %v855
        %857 = vdwg.mxu0
        %v858 = vmul.f32 %v856, %v831
        %860 = vrot.lane.b32.xlu0 %v858, 24
        %v861 = vpop.permute.xlu0 %860
        %vm863 = vcmask 261312
        %864 = vst.msk [vmem:[#allocation2] sm:$0xff] %vm863, %v861
        %v865 = vld [vmem:[#allocation2] sm:$0xff]
        %v866 = vld [vmem:[%s5] sm:$0xff]
        %v867 = vld [vmem:[%s5 + $0x8] sm:$0xff]
        %v868 = vld [vmem:[%s5 + $0x10] sm:$0xff]
        %v869 = vld [vmem:[%s5 + $0x18] sm:$0xff]
        %v870 = vld [vmem:[%s6] sm:$0x1]
        %v872 = vperm.slane %v870, 0
        %vm874 = vcmask 261120
        %v876 = vsel %vm874, %v865, 0
        %878 = vmatpush.msra.mxu0 0.0
        %879 = vmatpush.msra.mxu0 0.0
        %880 = vmatpush.msra.mxu0 0.0
        %881 = vmatpush.msra.mxu0 0.0
        %882 = vmatpush.msra.mxu0 0.0
        %883 = vmatpush.msra.mxu0 0.0
        %884 = vmatpush.msra.mxu0 0.0
        %885 = vmatpush.msra.mxu0 0.0
        %886 = vmatpush.msra.mxu0 0.0
        %887 = vmatpush.msra.mxu0 0.0
        %888 = vmatpush.msra.mxu0 0.0
        %889 = vmatpush.msra.mxu0 0.0
        %890 = vmatpush.msra.mxu0 %v869
        %891 = vmatpush.msra.mxu0 %v868
        %892 = vmatpush.msra.mxu0 %v867
        %893 = vmatpush.msra.mxu0 %v866
        %894 = vmatmul.f32.gmra.mxu0 %v876
        %v895 = vpop.f32.mrf.mxu0
        %v896 = vadd.f32 %v872, %v895
        %897 = vdwg.mxu0
        %v898 = vadd.f32 %v581, %v896
        %v899 = vsel %vm874, %v898, 0.0
        %900 = vadd.xlane.f32.xlu0 %v899
        %v901 = vpop.xlane.xlu0 %900
        %v902 = vrcp.pop 32.0
        %v903 = vmul.f32 32.0, %v902
        %v904 = vsub.f32 1.0, %v903
        %v905 = vmul.f32 %v902, %v904
        %v906 = vadd.f32 %v902, %v905
        %vm907 = vweird.f32 %v902
        %v908 = vsel %vm907, %v902, %v906
        %v909 = vmul.f32 %v901, %v908
        %v910 = vsub.f32 %v898, %v909
        %v911 = vmul.f32 %v910, %v910
        %v912 = vsel %vm874, %v911, 0.0
        %913 = vadd.xlane.f32.xlu0 %v912
        %v914 = vpop.xlane.xlu0 %913
        %v915 = vmul.f32 %v914, %v908
        %v916 = vadd.f32 %v915, 1e-06
        %v917 = vrsqrt.pop %v916
        %v918 = vmul.f32 %v917, %v916
        %v919 = vmul.f32 %v918, %v917
        %v920 = vmul.f32 0.5, %v919
        %v921 = vsub.f32 1.5, %v920
        %v922 = vmul.f32 %v917, %v921
        %vm923 = vweird.f32 %v916
        %vm924 = vweird.f32 %v917
        %vm925 = vmor %vm923, %vm924
        %v926 = vsel %vm925, %v917, %v922
        %v927 = vmul.f32 %v910, %v926
        %v928 = vld [vmem:[%s7] sm:$0x1]
        %v930 = vperm.slane %v928, 0
        %v932 = vmul.f32 %v927, %v930
        %v933 = vld [vmem:[%s8] sm:$0x1]
        %v935 = vperm.slane %v933, 0
        %v937 = vadd.f32 %v932, %v935
        %v938 = vld [vmem:[%s9] sm:$0xff]
        %v939 = vld [vmem:[%s9 + $0x8] sm:$0xff]
        %v940 = vld [vmem:[%s9 + $0x10] sm:$0xff]
        %v941 = vld [vmem:[%s9 + $0x18] sm:$0xff]
        %v942 = vld [vmem:[%s10] sm:$0x1]
        %v944 = vperm.slane %v942, 0
        %v947 = vsel %vm874, %v937, 0
        %949 = vmatpush.msra.mxu0 0.0
        %950 = vmatpush.msra.mxu0 0.0
        %951 = vmatpush.msra.mxu0 0.0
        %952 = vmatpush.msra.mxu0 0.0
        %953 = vmatpush.msra.mxu0 0.0
        %954 = vmatpush.msra.mxu0 0.0
        %955 = vmatpush.msra.mxu0 0.0
        %956 = vmatpush.msra.mxu0 0.0
        %957 = vmatpush.msra.mxu0 0.0
        %958 = vmatpush.msra.mxu0 0.0
        %959 = vmatpush.msra.mxu0 0.0
        %960 = vmatpush.msra.mxu0 0.0
        %961 = vmatpush.msra.mxu0 %v941
        %962 = vmatpush.msra.mxu0 %v940
        %963 = vmatpush.msra.mxu0 %v939
        %964 = vmatpush.msra.mxu0 %v938
        %965 = vmatmul.f32.gmra.mxu0 %v947
        %v966 = vpop.f32.mrf.mxu0
        %v967 = vadd.f32 %v944, %v966
        %968 = vdwg.mxu0
        %v969 = vmax.f32 %v967, 0.0
        %v970 = vld [vmem:[%s11] sm:$0xff]
        %v971 = vld [vmem:[%s11 + $0x8] sm:$0xff]
        %v972 = vld [vmem:[%s11 + $0x10] sm:$0xff]
        %v973 = vld [vmem:[%s11 + $0x18] sm:$0xff]
        %v974 = vld [vmem:[%s11 + $0x20] sm:$0xff]
        %v975 = vld [vmem:[%s11 + $0x28] sm:$0xff]
        %v976 = vld [vmem:[%s11 + $0x30] sm:$0xff]
        %v977 = vld [vmem:[%s11 + $0x38] sm:$0xff]
        %v978 = vld [vmem:[%s12] sm:$0x1]
        %v980 = vperm.slane %v978, 0
        %vm982 = vcmask 523264
        %v984 = vsel %vm982, %v969, 0
        %986 = vmatpush.msra.mxu0 0.0
        %987 = vmatpush.msra.mxu0 0.0
        %988 = vmatpush.msra.mxu0 0.0
        %989 = vmatpush.msra.mxu0 0.0
        %990 = vmatpush.msra.mxu0 0.0
        %991 = vmatpush.msra.mxu0 0.0
        %992 = vmatpush.msra.mxu0 0.0
        %993 = vmatpush.msra.mxu0 0.0
        %994 = vmatpush.msra.mxu0 %v977
        %995 = vmatpush.msra.mxu0 %v976
        %996 = vmatpush.msra.mxu0 %v975
        %997 = vmatpush.msra.mxu0 %v974
        %998 = vmatpush.msra.mxu0 %v973
        %999 = vmatpush.msra.mxu0 %v972
        %1000 = vmatpush.msra.mxu0 %v971
        %1001 = vmatpush.msra.mxu0 %v970
        %1002 = vmatmul.f32.gmra.mxu0 %v984
        %v1003 = vpop.f32.mrf.mxu0
        %v1004 = vadd.f32 %v980, %v1003
        %1005 = vdwg.mxu0
        %v1006 = vadd.f32 %v898, %v1004
        %1007 = vst.msk [vmem:[%s563] sm:$0xff] %vm874, %v1006
        %s1008 = sand.u32 %s357, 1
        %s1009 = scalar_lea.sflag [#allocation5], %s1008
        %s1010 = sand.u32 %s357, 1
        %s1011 = smul.addr %s1010, 8
        %s1012 = scalar_lea.vmem [#allocation8], %s1011
        // Predicated region
        $region81: #{tpu_custom_call.1} parent=71 // pred_check
          %p1013 = pneg %p367
        $region82: #{tpu_custom_call.1} parent=71 // pred_check_branch
          %1015 = sbr.rel (%p1013) target = $region84
        $region83: #{tpu_custom_call.1} parent=71 // pred_region
          %1017 = vsyncadd %s1009, 0
          %s1018 = sadd.s32 %s38, %s37
          %s1019 = smul.addr %s1018, 8
          %s1020 = scalar_lea.hbm %s13, %s1019
          %s1022 = sshll.u32 %s1012, 4
          %s1023 = int_to_ptr.vmem [resolvable:$true] %s1022
          %s1024 = sshll.u32 %s1020, 4
          %s1025 = int_to_ptr.hbm [resolvable:$true] %s1024
          %1027 = dma.vmem_to_hbm [thread:$0]  %s1023, 128, %s1025, %s1009
        $region84: #{tpu_custom_call.1} parent=71 // pred_fallthru
          _
      $region72: #{tpu_custom_call.1} parent=5 // pred_fallthru
        _
      %p1028 = scmp.le.s32.totalorder 2, %s28
      // Predicated region
      $region85: #{tpu_custom_call.1} parent=5 // pred_check
        %p1029 = pneg %p1028
      $region86: #{tpu_custom_call.1} parent=5 // pred_check_branch
        %1031 = sbr.rel (%p1029) target = $region88
      $region87: #{tpu_custom_call.1} parent=5 // pred_region
        %s1032 = ssub.s32 %s28, 2
        // Predicated region
        $region89: #{tpu_custom_call.1} parent=87 // pred_check
          %p1033 = pneg %p373
        $region90: #{tpu_custom_call.1} parent=87 // pred_check_branch
          %1035 = sbr.rel (%p1033) target = $region92
        $region91: #{tpu_custom_call.1} parent=87 // pred_region
          %s1036 = sand.u32 %s358, 1
          %s1037 = scalar_lea.sflag [#allocation5], %s1036
          %s1038 = sand.u32 %s358, 1
          %s1039 = smul.addr %s1038, 8
          %s1040 = scalar_lea.vmem [#allocation8], %s1039
          %1042 = dma.done %s1037, 128
        $region92: #{tpu_custom_call.1} parent=87 // pred_fallthru
          _
      $region88: #{tpu_custom_call.1} parent=5 // pred_fallthru
        _
    $region6: #{tpu_custom_call.1} parent=1 // loop_footer
      %s32 = sadd.s32 1, %s28
    $region7: #{tpu_custom_call.1} parent=1 // loop_footer_branch
      %27 = sbr.rel target = $region3
    $region8: #{tpu_custom_call.1} parent=1 // loop_exit
      _
    %1043 = vsyncpa [#allocation4], 1
    %s1044 = scalar_lea.sflag [#allocation4], 1
    %1045 = vsyncpa %s1044, 1
    %1046 = vsyncpa [#allocation7], 1
    %s1047 = scalar_lea.sflag [#allocation7], 1
    %1048 = vsyncpa %s1047, 1
    %1049 = vsyncpa [#allocation5], 1
    %s1050 = scalar_lea.sflag [#allocation5], 1
    %1051 = vsyncpa %s1050, 1

// kernel: tpu_custom_call.1
$region0: #{tpu_custom_call.1}
  #allocation0 [shape = 'u32[]', space=smem, size = 0x4, offset = 0x4, fixed_abs, tag = 'smem constant byte address 0x4 - core index']
  #allocation1 [shape = 'u32[72,128]{1,0:T(1,128)}', space=vmem, size = 0x9000, scoped, tag = 'internal scratch']
  #allocation2 [shape = 'f32[8,32]{1,0:T(8,128)}', space=vmem, size = 0x1000, scoped, tag = 'scratch operand']
  %s0 = inlined_call_operand.vmem [shape: f32[2,8,32], index: 0, kind: input, shape index: {}]
  %s1 = inlined_call_operand.vmem [shape: f32[2,8,32], index: 1, kind: input, shape index: {}]
  %s2 = inlined_call_operand.hbm [shape: f32[2,8,32], index: 2, kind: input, shape index: {}]
  %s3 = inlined_call_operand.hbm [shape: f32[2,8,32], index: 3, kind: input, shape index: {}]
  %s4 = inlined_call_operand.vmem [shape: f32[2,1,8], index: 4, kind: input, shape index: {}]
  %s5 = inlined_call_operand.vmem [shape: f32[32,32], index: 5, kind: input, shape index: {}]
  %s6 = inlined_call_operand.vmem [shape: f32[1,32], index: 6, kind: input, shape index: {}]
  %s7 = inlined_call_operand.vmem [shape: f32[1,32], index: 7, kind: input, shape index: {}]
  %s8 = inlined_call_operand.vmem [shape: f32[1,32], index: 8, kind: input, shape index: {}]
  %s9 = inlined_call_operand.vmem [shape: f32[32,64], index: 9, kind: input, shape index: {}]
  %s10 = inlined_call_operand.vmem [shape: f32[1,64], index: 10, kind: input, shape index: {}]
  %s11 = inlined_call_operand.vmem [shape: f32[64,32], index: 11, kind: input, shape index: {}]
  %s12 = inlined_call_operand.vmem [shape: f32[1,32], index: 12, kind: input, shape index: {}]
  %s13 = inlined_call_operand.hbm [shape: f32[2,8,32], index: 13, kind: output, shape index: {}]
  %s14 = sld [smem:[#allocation0]]
  $region93: #{tpu_custom_call.1} parent=0
    _
  %s16 = ssub.s32 1, %s14
  %s17 = scalar_select 0, %s16, %s14
  $region1: #{tpu_custom_call.1} parent=0
    #allocation3 [shape = 'u8[8192]{0}', space=vmem, size = 0x2000, scoped, tag = 'input window, operand 2']
    #allocation4 [shape = 's32[2]{0}', space=sflag, size = 0x8, scoped, tag = 'scoped memory for tpu_custom_call.1']
    #allocation5 [shape = 's32[2]{0}', space=sflag, size = 0x8, scoped, tag = 'scoped memory for tpu_custom_call.1']
    #allocation6 [shape = 'u8[8192]{0}', space=vmem, size = 0x2000, scoped, tag = 'input window, operand 3']
    #allocation7 [shape = 's32[2]{0}', space=sflag, size = 0x8, scoped, tag = 'scoped memory for tpu_custom_call.1']
    #allocation8 [shape = 'u8[8192]{0}', space=vmem, size = 0x2000, scoped, tag = 'output window, operand 0']
    %18 = vsyncpa [#allocation4], 0
    %s19 = scalar_lea.sflag [#allocation4], 1
    %20 = vsyncpa %s19, 0
    %21 = vsyncpa [#allocation7], 0
    %s22 = scalar_lea.sflag [#allocation7], 1
    %23 = vsyncpa %s22, 0
    %24 = vsyncpa [#allocation5], 0
    %s25 = scalar_lea.sflag [#allocation5], 1
    %26 = vsyncpa %s25, 0
    loop: start=0, step=1, limit=4
    $region2: #{tpu_custom_call.1} parent=1 // loop_pre_header
      _
    $region3: #{tpu_custom_call.1} parent=1 // loop_header
      %s28 = sphi 0, %s32
      %p29 = scmp.ge.s32.totalorder %s28, 4
      %s35 = sphi 0, %s47
      %s36 = sphi 0, %s43
      %s37 = sphi 0, %s35
      %s38 = sphi 0, %s36
      %s39 = sphi 0, %s37
      %s40 = sphi 0, %s38
      %s52 = sphi 0, %s54
      %s55 = sphi 0, %s52
      %s56 = sphi 0, %s55
      %s72 = sphi 0, %s56
      %s80 = sphi 0, %s82
      %s83 = sphi 0, %s80
      %s84 = sphi 0, %s83
      %s100 = sphi 0, %s84
      %s106 = sphi 0, %s108
      %s109 = sphi 0, %s106
      %s110 = sphi 0, %s109
      %s126 = sphi 0, %s110
      %s132 = sphi 0, %s134
      %s135 = sphi 0, %s132
      %s136 = sphi 0, %s135
      %s152 = sphi 0, %s136
      %s158 = sphi 0, %s160
      %s161 = sphi 0, %s158
      %s162 = sphi 0, %s161
      %s178 = sphi 0, %s162
      %s182 = sphi 0, %s182
      %s184 = sphi 0, %s182
      %s185 = sphi 0, %s184
      %s199 = sphi 0, %s185
      %s203 = sphi 0, %s203
      %s205 = sphi 0, %s203
      %s206 = sphi 0, %s205
      %s220 = sphi 0, %s206
      %s224 = sphi 0, %s224
      %s226 = sphi 0, %s224
      %s227 = sphi 0, %s226
      %s241 = sphi 0, %s227
      %s245 = sphi 0, %s245
      %s247 = sphi 0, %s245
      %s248 = sphi 0, %s247
      %s262 = sphi 0, %s248
      %s266 = sphi 0, %s266
      %s268 = sphi 0, %s266
      %s269 = sphi 0, %s268
      %s283 = sphi 0, %s269
      %s287 = sphi 0, %s287
      %s289 = sphi 0, %s287
      %s290 = sphi 0, %s289
      %s304 = sphi 0, %s290
      %s308 = sphi 0, %s308
      %s310 = sphi 0, %s308
      %s311 = sphi 0, %s310
      %s325 = sphi 0, %s311
      %s329 = sphi 0, %s329
      %s331 = sphi 0, %s329
      %s332 = sphi 0, %s331
      %s346 = sphi 0, %s332
      %s354 = sphi 0, %s356
      %s357 = sphi 0, %s354
      %s358 = sphi 0, %s357
      %s374 = sphi 0, %s358
    $region4: #{tpu_custom_call.1} parent=1 // loop_header_branch
      %31 = sbr.rel (%p29) target = $region8
    $region5: #{tpu_custom_call.1} parent=1 // loop_body
      %s33 = ssub.s32 %s28, 1
      %s34 = ssub.s32 %s28, 2
      %s41 = sadd.s32 1, %s36
      %p42 = scmp.ge.s32.totalorder %s41, 1
      %s43 = scalar_select %p42, 0, %s41
      %s44 = sadd.s32 1, %s35
      %s45 = scalar_select %p42, %s44, %s35
      %p46 = scmp.ge.s32.totalorder %s45, 2
      %s47 = scalar_select %p46, 0, %s45
      %s48 = ssub.s32 %s35, %s47
      %s49 = ssub.s32 %s36, %s43
      %s50 = sor.u32 %s48, %s49
      %p51 = scmp.eq.s32.totalorder %s50, 0
      %s53 = sadd.s32 %s52, 1
      %s54 = scalar_select %p51, %s52, %s53
      %p57 = pneg %p51
      %p58 = scmp.eq.s32.totalorder %s28, 1
      %p59 = por %p57, %p58
      %p60 = scmp.ne.s32.totalorder %s52, %s55
      %p61 = scmp.eq.s32.totalorder %s28, 0
      %p62 = por %p60, %p61
      %p63 = scmp.ne.s32.totalorder %s52, %s55
      %p64 = scmp.eq.s32.totalorder %s33, 1
      %p65 = por %p63, %p64
      %p66 = scmp.ne.s32.totalorder %s55, %s56
      %p67 = scmp.eq.s32.totalorder %s33, 0
      %p68 = por %p66, %p67
      %p69 = scmp.ne.s32.totalorder %s55, %s56
      %p70 = scmp.eq.s32.totalorder %s34, 1
      %p71 = por %p69, %p70
      %p73 = scmp.ne.s32.totalorder %s56, %s72
      %p74 = scmp.eq.s32.totalorder %s34, 0
      %p75 = por %p73, %p74
      %s76 = ssub.s32 %s35, %s47
      %s77 = ssub.s32 %s36, %s43
      %s78 = sor.u32 %s76, %s77
      %p79 = scmp.eq.s32.totalorder %s78, 0
      %s81 = sadd.s32 %s80, 1
      %s82 = scalar_select %p79, %s80, %s81
      %p85 = pneg %p79
      %p86 = scmp.eq.s32.totalorder %s28, 1
      %p87 = por %p85, %p86
      %p88 = scmp.ne.s32.totalorder %s80, %s83
      %p89 = scmp.eq.s32.totalorder %s28, 0
      %p90 = por %p88, %p89
      %p91 = scmp.ne.s32.totalorder %s80, %s83
      %p92 = scmp.eq.s32.totalorder %s33, 1
      %p93 = por %p91, %p92
      %p94 = scmp.ne.s32.totalorder %s83, %s84
      %p95 = scmp.eq.s32.totalorder %s33, 0
      %p96 = por %p94, %p95
      %p97 = scmp.ne.s32.totalorder %s83, %s84
      %p98 = scmp.eq.s32.totalorder %s34, 1
      %p99 = por %p97, %p98
      %p101 = scmp.ne.s32.totalorder %s84, %s100
      %p102 = scmp.eq.s32.totalorder %s34, 0
      %p103 = por %p101, %p102
      %s104 = ssub.s32 %s35, %s47
      %p105 = scmp.eq.s32.totalorder %s104, 0
      %s107 = sadd.s32 %s106, 1
      %s108 = scalar_select %p105, %s106, %s107
      %p111 = pneg %p105
      %p112 = scmp.eq.s32.totalorder %s28, 1
      %p113 = por %p111, %p112
      %p114 = scmp.ne.s32.totalorder %s106, %s109
      %p115 = scmp.eq.s32.totalorder %s28, 0
      %p116 = por %p114, %p115
      %p117 = scmp.ne.s32.totalorder %s106, %s109
      %p118 = scmp.eq.s32.totalorder %s33, 1
      %p119 = por %p117, %p118
      %p120 = scmp.ne.s32.totalorder %s109, %s110
      %p121 = scmp.eq.s32.totalorder %s33, 0
      %p122 = por %p120, %p121
      %p123 = scmp.ne.s32.totalorder %s109, %s110
      %p124 = scmp.eq.s32.totalorder %s34, 1
      %p125 = por %p123, %p124
      %p127 = scmp.ne.s32.totalorder %s110, %s126
      %p128 = scmp.eq.s32.totalorder %s34, 0
      %p129 = por %p127, %p128
      %s130 = ssub.s32 %s35, %s47
      %p131 = scmp.eq.s32.totalorder %s130, 0
      %s133 = sadd.s32 %s132, 1
      %s134 = scalar_select %p131, %s132, %s133
      %p137 = pneg %p131
      %p138 = scmp.eq.s32.totalorder %s28, 1
      %p139 = por %p137, %p138
      %p140 = scmp.ne.s32.totalorder %s132, %s135
      %p141 = scmp.eq.s32.totalorder %s28, 0
      %p142 = por %p140, %p141
      %p143 = scmp.ne.s32.totalorder %s132, %s135
      %p144 = scmp.eq.s32.totalorder %s33, 1
      %p145 = por %p143, %p144
      %p146 = scmp.ne.s32.totalorder %s135, %s136
      %p147 = scmp.eq.s32.totalorder %s33, 0
      %p148 = por %p146, %p147
      %p149 = scmp.ne.s32.totalorder %s135, %s136
      %p150 = scmp.eq.s32.totalorder %s34, 1
      %p151 = por %p149, %p150
      %p153 = scmp.ne.s32.totalorder %s136, %s152
      %p154 = scmp.eq.s32.totalorder %s34, 0
      %p155 = por %p153, %p154
      %s156 = ssub.s32 %s35, %s47
      %p157 = scmp.eq.s32.totalorder %s156, 0
      %s159 = sadd.s32 %s158, 1
      %s160 = scalar_select %p157, %s158, %s159
      %p163 = pneg %p157
      %p164 = scmp.eq.s32.totalorder %s28, 1
      %p165 = por %p163, %p164
      %p166 = scmp.ne.s32.totalorder %s158, %s161
      %p167 = scmp.eq.s32.totalorder %s28, 0
      %p168 = por %p166, %p167
      %p169 = scmp.ne.s32.totalorder %s158, %s161
      %p170 = scmp.eq.s32.totalorder %s33, 1
      %p171 = por %p169, %p170
      %p172 = scmp.ne.s32.totalorder %s161, %s162
      %p173 = scmp.eq.s32.totalorder %s33, 0
      %p174 = por %p172, %p173
      %p175 = scmp.ne.s32.totalorder %s161, %s162
      %p176 = scmp.eq.s32.totalorder %s34, 1
      %p177 = por %p175, %p176
      %p179 = scmp.ne.s32.totalorder %s162, %s178
      %p180 = scmp.eq.s32.totalorder %s34, 0
      %p181 = por %p179, %p180
      %s183 = sadd.s32 %s182, 1
      %p186 = scmp.eq.s32.totalorder %s28, 1
      %p187 = scmp.ne.s32.totalorder %s182, %s184
      %p188 = scmp.eq.s32.totalorder %s28, 0
      %p189 = por %p187, %p188
      %p190 = scmp.ne.s32.totalorder %s182, %s184
      %p191 = scmp.eq.s32.totalorder %s33, 1
      %p192 = por %p190, %p191
      %p193 = scmp.ne.s32.totalorder %s184, %s185
      %p194 = scmp.eq.s32.totalorder %s33, 0
      %p195 = por %p193, %p194
      %p196 = scmp.ne.s32.totalorder %s184, %s185
      %p197 = scmp.eq.s32.totalorder %s34, 1
      %p198 = por %p196, %p197
      %p200 = scmp.ne.s32.totalorder %s185, %s199
      %p201 = scmp.eq.s32.totalorder %s34, 0
      %p202 = por %p200, %p201
      %s204 = sadd.s32 %s203, 1
      %p207 = scmp.eq.s32.totalorder %s28, 1
      %p208 = scmp.ne.s32.totalorder %s203, %s205
      %p209 = scmp.eq.s32.totalorder %s28, 0
      %p210 = por %p208, %p209
      %p211 = scmp.ne.s32.totalorder %s203, %s205
      %p212 = scmp.eq.s32.totalorder %s33, 1
      %p213 = por %p211, %p212
      %p214 = scmp.ne.s32.totalorder %s205, %s206
      %p215 = scmp.eq.s32.totalorder %s33, 0
      %p216 = por %p214, %p215
      %p217 = scmp.ne.s32.totalorder %s205, %s206
      %p218 = scmp.eq.s32.totalorder %s34, 1
      %p219 = por %p217, %p218
      %p221 = scmp.ne.s32.totalorder %s206, %s220
      %p222 = scmp.eq.s32.totalorder %s34, 0
      %p223 = por %p221, %p222
      %s225 = sadd.s32 %s224, 1
      %p228 = scmp.eq.s32.totalorder %s28, 1
      %p229 = scmp.ne.s32.totalorder %s224, %s226
      %p230 = scmp.eq.s32.totalorder %s28, 0
      %p231 = por %p229, %p230
      %p232 = scmp.ne.s32.totalorder %s224, %s226
      %p233 = scmp.eq.s32.totalorder %s33, 1
      %p234 = por %p232, %p233
      %p235 = scmp.ne.s32.totalorder %s226, %s227
      %p236 = scmp.eq.s32.totalorder %s33, 0
      %p237 = por %p235, %p236
      %p238 = scmp.ne.s32.totalorder %s226, %s227
      %p239 = scmp.eq.s32.totalorder %s34, 1
      %p240 = por %p238, %p239
      %p242 = scmp.ne.s32.totalorder %s227, %s241
      %p243 = scmp.eq.s32.totalorder %s34, 0
      %p244 = por %p242, %p243
      %s246 = sadd.s32 %s245, 1
      %p249 = scmp.eq.s32.totalorder %s28, 1
      %p250 = scmp.ne.s32.totalorder %s245, %s247
      %p251 = scmp.eq.s32.totalorder %s28, 0
      %p252 = por %p250, %p251
      %p253 = scmp.ne.s32.totalorder %s245, %s247
      %p254 = scmp.eq.s32.totalorder %s33, 1
      %p255 = por %p253, %p254
      %p256 = scmp.ne.s32.totalorder %s247, %s248
      %p257 = scmp.eq.s32.totalorder %s33, 0
      %p258 = por %p256, %p257
      %p259 = scmp.ne.s32.totalorder %s247, %s248
      %p260 = scmp.eq.s32.totalorder %s34, 1
      %p261 = por %p259, %p260
      %p263 = scmp.ne.s32.totalorder %s248, %s262
      %p264 = scmp.eq.s32.totalorder %s34, 0
      %p265 = por %p263, %p264
      %s267 = sadd.s32 %s266, 1
      %p270 = scmp.eq.s32.totalorder %s28, 1
      %p271 = scmp.ne.s32.totalorder %s266, %s268
      %p272 = scmp.eq.s32.totalorder %s28, 0
      %p273 = por %p271, %p272
      %p274 = scmp.ne.s32.totalorder %s266, %s268
      %p275 = scmp.eq.s32.totalorder %s33, 1
      %p276 = por %p274, %p275
      %p277 = scmp.ne.s32.totalorder %s268, %s269
      %p278 = scmp.eq.s32.totalorder %s33, 0
      %p279 = por %p277, %p278
      %p280 = scmp.ne.s32.totalorder %s268, %s269
      %p281 = scmp.eq.s32.totalorder %s34, 1
      %p282 = por %p280, %p281
      %p284 = scmp.ne.s32.totalorder %s269, %s283
      %p285 = scmp.eq.s32.totalorder %s34, 0
      %p286 = por %p284, %p285
      %s288 = sadd.s32 %s287, 1
      %p291 = scmp.eq.s32.totalorder %s28, 1
      %p292 = scmp.ne.s32.totalorder %s287, %s289
      %p293 = scmp.eq.s32.totalorder %s28, 0
      %p294 = por %p292, %p293
      %p295 = scmp.ne.s32.totalorder %s287, %s289
      %p296 = scmp.eq.s32.totalorder %s33, 1
      %p297 = por %p295, %p296
      %p298 = scmp.ne.s32.totalorder %s289, %s290
      %p299 = scmp.eq.s32.totalorder %s33, 0
      %p300 = por %p298, %p299
      %p301 = scmp.ne.s32.totalorder %s289, %s290
      %p302 = scmp.eq.s32.totalorder %s34, 1
      %p303 = por %p301, %p302
      %p305 = scmp.ne.s32.totalorder %s290, %s304
      %p306 = scmp.eq.s32.totalorder %s34, 0
      %p307 = por %p305, %p306
      %s309 = sadd.s32 %s308, 1
      %p312 = scmp.eq.s32.totalorder %s28, 1
      %p313 = scmp.ne.s32.totalorder %s308, %s310
      %p314 = scmp.eq.s32.totalorder %s28, 0
      %p315 = por %p313, %p314
      %p316 = scmp.ne.s32.totalorder %s308, %s310
      %p317 = scmp.eq.s32.totalorder %s33, 1
      %p318 = por %p316, %p317
      %p319 = scmp.ne.s32.totalorder %s310, %s311
      %p320 = scmp.eq.s32.totalorder %s33, 0
      %p321 = por %p319, %p320
      %p322 = scmp.ne.s32.totalorder %s310, %s311
      %p323 = scmp.eq.s32.totalorder %s34, 1
      %p324 = por %p322, %p323
      %p326 = scmp.ne.s32.totalorder %s311, %s325
      %p327 = scmp.eq.s32.totalorder %s34, 0
      %p328 = por %p326, %p327
      %s330 = sadd.s32 %s329, 1
      %p333 = scmp.eq.s32.totalorder %s28, 1
      %p334 = scmp.ne.s32.totalorder %s329, %s331
      %p335 = scmp.eq.s32.totalorder %s28, 0
      %p336 = por %p334, %p335
      %p337 = scmp.ne.s32.totalorder %s329, %s331
      %p338 = scmp.eq.s32.totalorder %s33, 1
      %p339 = por %p337, %p338
      %p340 = scmp.ne.s32.totalorder %s331, %s332
      %p341 = scmp.eq.s32.totalorder %s33, 0
      %p342 = por %p340, %p341
      %p343 = scmp.ne.s32.totalorder %s331, %s332
      %p344 = scmp.eq.s32.totalorder %s34, 1
      %p345 = por %p343, %p344
      %p347 = scmp.ne.s32.totalorder %s332, %s346
      %p348 = scmp.eq.s32.totalorder %s34, 0
      %p349 = por %p347, %p348
      %s350 = ssub.s32 %s35, %s47
      %s351 = ssub.s32 %s36, %s43
      %s352 = sor.u32 %s350, %s351
      %p353 = scmp.eq.s32.totalorder %s352, 0
      %s355 = sadd.s32 %s354, 1
      %s356 = scalar_select %p353, %s354, %s355
      %p359 = pneg %p353
      %p360 = scmp.eq.s32.totalorder %s28, 1
      %p361 = por %p359, %p360
      %p362 = scmp.ne.s32.totalorder %s354, %s357
      %p363 = scmp.eq.s32.totalorder %s28, 0
      %p364 = por %p362, %p363
      %p365 = scmp.ne.s32.totalorder %s354, %s357
      %p366 = scmp.eq.s32.totalorder %s33, 1
      %p367 = por %p365, %p366
      %p368 = scmp.ne.s32.totalorder %s357, %s358
      %p369 = scmp.eq.s32.totalorder %s33, 0
      %p370 = por %p368, %p369
      %p371 = scmp.ne.s32.totalorder %s357, %s358
      %p372 = scmp.eq.s32.totalorder %s34, 1
      %p373 = por %p371, %p372
      %p375 = scmp.ne.s32.totalorder %s358, %s374
      %p376 = scmp.eq.s32.totalorder %s34, 0
      %p377 = por %p375, %p376
      %p378 = scmp.le.s32.totalorder 1, %s28
      %p379 = scmp.lt.s32.totalorder %s28, 3
      %p380 = pnand %p378, %p379
      %p381 = pneg %p380
      // Predicated region
      $region9: #{tpu_custom_call.1} parent=5 // pred_check
        _
      $region10: #{tpu_custom_call.1} parent=5 // pred_check_branch
        %383 = sbr.rel (%p380) target = $region12
      $region11: #{tpu_custom_call.1} parent=5 // pred_region
        %s384 = ssub.s32 %s28, 1
        // Predicated region
        $region13: #{tpu_custom_call.1} parent=11 // pred_check
          %p385 = pneg %p195
        $region14: #{tpu_custom_call.1} parent=11 // pred_check_branch
          %387 = sbr.rel (%p385) target = $region16
        $region15: #{tpu_custom_call.1} parent=11 // pred_region
          _
        $region16: #{tpu_custom_call.1} parent=11 // pred_fallthru
          _
        // Predicated region
        $region17: #{tpu_custom_call.1} parent=11 // pred_check
          %p388 = pneg %p216
        $region18: #{tpu_custom_call.1} parent=11 // pred_check_branch
          %390 = sbr.rel (%p388) target = $region20
        $region19: #{tpu_custom_call.1} parent=11 // pred_region
          _
        $region20: #{tpu_custom_call.1} parent=11 // pred_fallthru
          _
        // Predicated region
        $region21: #{tpu_custom_call.1} parent=11 // pred_check
          %p391 = pneg %p237
        $region22: #{tpu_custom_call.1} parent=11 // pred_check_branch
          %393 = sbr.rel (%p391) target = $region24
        $region23: #{tpu_custom_call.1} parent=11 // pred_region
          _
        $region24: #{tpu_custom_call.1} parent=11 // pred_fallthru
          _
        // Predicated region
        $region25: #{tpu_custom_call.1} parent=11 // pred_check
          %p394 = pneg %p258
        $region26: #{tpu_custom_call.1} parent=11 // pred_check_branch
          %396 = sbr.rel (%p394) target = $region28
        $region27: #{tpu_custom_call.1} parent=11 // pred_region
          _
        $region28: #{tpu_custom_call.1} parent=11 // pred_fallthru
          _
        // Predicated region
        $region29: #{tpu_custom_call.1} parent=11 // pred_check
          %p397 = pneg %p279
        $region30: #{tpu_custom_call.1} parent=11 // pred_check_branch
          %399 = sbr.rel (%p397) target = $region32
        $region31: #{tpu_custom_call.1} parent=11 // pred_region
          _
        $region32: #{tpu_custom_call.1} parent=11 // pred_fallthru
          _
        // Predicated region
        $region33: #{tpu_custom_call.1} parent=11 // pred_check
          %p400 = pneg %p300
        $region34: #{tpu_custom_call.1} parent=11 // pred_check_branch
          %402 = sbr.rel (%p400) target = $region36
        $region35: #{tpu_custom_call.1} parent=11 // pred_region
          _
        $region36: #{tpu_custom_call.1} parent=11 // pred_fallthru
          _
        // Predicated region
        $region37: #{tpu_custom_call.1} parent=11 // pred_check
          %p403 = pneg %p321
        $region38: #{tpu_custom_call.1} parent=11 // pred_check_branch
          %405 = sbr.rel (%p403) target = $region40
        $region39: #{tpu_custom_call.1} parent=11 // pred_region
          _
        $region40: #{tpu_custom_call.1} parent=11 // pred_fallthru
          _
        // Predicated region
        $region41: #{tpu_custom_call.1} parent=11 // pred_check
          %p406 = pneg %p342
        $region42: #{tpu_custom_call.1} parent=11 // pred_check_branch
          %408 = sbr.rel (%p406) target = $region44
        $region43: #{tpu_custom_call.1} parent=11 // pred_region
          _
        $region44: #{tpu_custom_call.1} parent=11 // pred_fallthru
          _
      $region12: #{tpu_custom_call.1} parent=5 // pred_fallthru
        _
      %p409 = scmp.lt.s32.totalorder %s28, 2
      // Predicated region
      $region45: #{tpu_custom_call.1} parent=5 // pred_check
        %p410 = pneg %p409
      $region46: #{tpu_custom_call.1} parent=5 // pred_check_branch
        %412 = sbr.rel (%p410) target = $region48
      $region47: #{tpu_custom_call.1} parent=5 // pred_region
        // Predicated region
        $region49: #{tpu_custom_call.1} parent=47 // pred_check
          %p413 = pneg %p62
        $region50: #{tpu_custom_call.1} parent=47 // pred_check_branch
          %415 = sbr.rel (%p413) target = $region52
        $region51: #{tpu_custom_call.1} parent=47 // pred_region
          %p416 = scmp.lt.s32.totalorder %s35, 1
          %s417 = scalar_select %p416, %s35, 1
          %p418 = scmp.lt.s32.totalorder %s36, 0
          %s419 = scalar_select %p418, %s36, 0
          %s420 = sadd.s32 %s419, %s417
          %s421 = smul.addr %s420, 8
          %s422 = scalar_lea.vmem %s0, %s421
        $region52: #{tpu_custom_call.1} parent=47 // pred_fallthru
          _
        // Predicated region
        $region53: #{tpu_custom_call.1} parent=47 // pred_check
          %p423 = pneg %p90
        $region54: #{tpu_custom_call.1} parent=47 // pred_check_branch
          %425 = sbr.rel (%p423) target = $region56
        $region55: #{tpu_custom_call.1} parent=47 // pred_region
          %p426 = scmp.lt.s32.totalorder %s35, 1
          %s427 = scalar_select %p426, %s35, 1
          %p428 = scmp.lt.s32.totalorder %s36, 0
          %s429 = scalar_select %p428, %s36, 0
          %s430 = sadd.s32 %s429, %s427
          %s431 = smul.addr %s430, 8
          %s432 = scalar_lea.vmem %s1, %s431
        $region56: #{tpu_custom_call.1} parent=47 // pred_fallthru
          _
        // Predicated region
        $region57: #{tpu_custom_call.1} parent=47 // pred_check
          %p433 = pneg %p116
        $region58: #{tpu_custom_call.1} parent=47 // pred_check_branch
          %435 = sbr.rel (%p433) target = $region60
        $region59: #{tpu_custom_call.1} parent=47 // pred_region
          %s436 = sand.u32 %s106, 1
          %s437 = scalar_lea.sflag [#allocation4], %s436
          %s438 = sand.u32 %s106, 1
          %s439 = smul.addr %s438, 8
          %s440 = scalar_lea.vmem [#allocation3], %s439
          %442 = vsyncadd %s437, 0
          %s443 = smul.addr %s35, 8
          %s444 = scalar_lea.hbm %s2, %s443
          %s446 = sshll.u32 %s444, 4
          %s447 = int_to_ptr.hbm [resolvable:$true] %s446
          %s448 = sshll.u32 %s440, 4
          %s449 = int_to_ptr.vmem [resolvable:$true] %s448
          %451 = dma.hbm_to_vmem [thread:$0]  %s447, 128, %s449, %s437
        $region60: #{tpu_custom_call.1} parent=47 // pred_fallthru
          _
        // Predicated region
        $region61: #{tpu_custom_call.1} parent=47 // pred_check
          %p452 = pneg %p142
        $region62: #{tpu_custom_call.1} parent=47 // pred_check_branch
          %454 = sbr.rel (%p452) target = $region64
        $region63: #{tpu_custom_call.1} parent=47 // pred_region
          %s455 = sand.u32 %s132, 1
          %s456 = scalar_lea.sflag [#allocation7], %s455
          %s457 = sand.u32 %s132, 1
          %s458 = smul.addr %s457, 8
          %s459 = scalar_lea.vmem [#allocation6], %s458
          %461 = vsyncadd %s456, 0
          %s462 = smul.addr %s35, 8
          %s463 = scalar_lea.hbm %s3, %s462
          %s465 = sshll.u32 %s463, 4
          %s466 = int_to_ptr.hbm [resolvable:$true] %s465
          %s467 = sshll.u32 %s459, 4
          %s468 = int_to_ptr.vmem [resolvable:$true] %s467
          %470 = dma.hbm_to_vmem [thread:$0]  %s466, 128, %s468, %s456
        $region64: #{tpu_custom_call.1} parent=47 // pred_fallthru
          _
        // Predicated region
        $region65: #{tpu_custom_call.1} parent=47 // pred_check
          %p471 = pneg %p168
        $region66: #{tpu_custom_call.1} parent=47 // pred_check_branch
          %473 = sbr.rel (%p471) target = $region68
        $region67: #{tpu_custom_call.1} parent=47 // pred_region
          %p474 = scmp.lt.s32.totalorder %s35, 1
          %s475 = scalar_select %p474, %s35, 1
          %s476 = scalar_lea.vmem %s4, %s475
        $region68: #{tpu_custom_call.1} parent=47 // pred_fallthru
          _
      $region48: #{tpu_custom_call.1} parent=5 // pred_fallthru
        _
      %p477 = scmp.le.s32.totalorder 1, %s28
      %p478 = scmp.lt.s32.totalorder %s28, 3
      %p479 = pnand %p477, %p478
      %p480 = pneg %p479
      // Predicated region
      $region69: #{tpu_custom_call.1} parent=5 // pred_check
        _
      $region70: #{tpu_custom_call.1} parent=5 // pred_check_branch
        %482 = sbr.rel (%p479) target = $region72
      $region71: #{tpu_custom_call.1} parent=5 // pred_region
        %s483 = ssub.s32 %s28, 1
        %s484 = sand.u32 %s109, 1
        %s485 = scalar_lea.sflag [#allocation4], %s484
        %s486 = sand.u32 %s109, 1
        %s487 = smul.addr %s486, 8
        %s488 = scalar_lea.vmem [#allocation3], %s487
        // Predicated region
        $region73: #{tpu_custom_call.1} parent=71 // pred_check
          %p489 = pneg %p122
        $region74: #{tpu_custom_call.1} parent=71 // pred_check_branch
          %491 = sbr.rel (%p489) target = $region76
        $region75: #{tpu_custom_call.1} parent=71 // pred_region
          %493 = dma.done %s485, 128
        $region76: #{tpu_custom_call.1} parent=71 // pred_fallthru
          _
        %s494 = sand.u32 %s135, 1
        %s495 = scalar_lea.sflag [#allocation7], %s494
        %s496 = sand.u32 %s135, 1
        %s497 = smul.addr %s496, 8
        %s498 = scalar_lea.vmem [#allocation6], %s497
        // Predicated region
        $region77: #{tpu_custom_call.1} parent=71 // pred_check
          %p499 = pneg %p148
        $region78: #{tpu_custom_call.1} parent=71 // pred_check_branch
          %501 = sbr.rel (%p499) target = $region80
        $region79: #{tpu_custom_call.1} parent=71 // pred_region
          %503 = dma.done %s495, 128
        $region80: #{tpu_custom_call.1} parent=71 // pred_fallthru
          _
        %p504 = scmp.lt.s32.totalorder %s37, 1
        %s505 = scalar_select %p504, %s37, 1
        %p506 = scmp.lt.s32.totalorder %s38, 0
        %s507 = scalar_select %p506, %s38, 0
        %s508 = sadd.s32 %s507, %s505
        %s509 = smul.addr %s508, 8
        %s510 = scalar_lea.vmem %s0, %s509
        %p511 = pneg %p68
        %p512 = pneg %p65
        %p513 = scmp.lt.s32.totalorder %s37, 1
        %s514 = scalar_select %p513, %s37, 1
        %p515 = scmp.lt.s32.totalorder %s38, 0
        %s516 = scalar_select %p515, %s38, 0
        %s517 = sadd.s32 %s516, %s514
        %s518 = smul.addr %s517, 8
        %s519 = scalar_lea.vmem %s1, %s518
        %p520 = pneg %p96
        %p521 = pneg %p93
        %s522 = sand.u32 %s109, 1
        %s523 = scalar_lea.sflag [#allocation4], %s522
        %s524 = sand.u32 %s109, 1
        %s525 = smul.addr %s524, 8
        %s526 = scalar_lea.vmem [#allocation3], %s525
        %p527 = pneg %p122
        %p528 = pneg %p119
        %s529 = sand.u32 %s135, 1
        %s530 = scalar_lea.sflag [#allocation7], %s529
        %s531 = sand.u32 %s135, 1
        %s532 = smul.addr %s531, 8
        %s533 = scalar_lea.vmem [#allocation6], %s532
        %p534 = pneg %p148
        %p535 = pneg %p145
        %p536 = scmp.lt.s32.totalorder %s37, 1
        %s537 = scalar_select %p536, %s37, 1
        %s538 = scalar_lea.vmem %s4, %s537
        %p539 = pneg %p174
        %p540 = pneg %p171
        %p541 = pneg %p195
        %p542 = pneg %p192
        %p543 = pneg %p216
        %p544 = pneg %p213
        %p545 = pneg %p237
        %p546 = pneg %p234
        %p547 = pneg %p258
        %p548 = pneg %p255
        %p549 = pneg %p279
        %p550 = pneg %p276
        %p551 = pneg %p300
        %p552 = pneg %p297
        %p553 = pneg %p321
        %p554 = pneg %p318
        %p555 = pneg %p342
        %p556 = pneg %p339
        %p557 = pneg %p370
        %p558 = pneg %p367
        %s559 = sand.u32 %s357, 1
        %s560 = scalar_lea.sflag [#allocation5], %s559
        %s561 = sand.u32 %s357, 1
        %s562 = smul.addr %s561, 8
        %s563 = scalar_lea.vmem [#allocation8], %s562
        %p564 = scmp.lt.s32.totalorder %s37, 1
        %s565 = scalar_select %p564, %s37, 1
        %p566 = scmp.lt.s32.totalorder %s38, 0
        %s567 = scalar_select %p566, %s38, 0
        %s568 = sadd.s32 %s567, %s565
        %s569 = smul.addr %s568, 8
        %s570 = scalar_lea.vmem %s0, %s569
        %p571 = scmp.lt.s32.totalorder %s37, 1
        %s572 = scalar_select %p571, %s37, 1
        %p573 = scmp.lt.s32.totalorder %s38, 0
        %s574 = scalar_select %p573, %s38, 0
        %s575 = sadd.s32 %s574, %s572
        %s576 = smul.addr %s575, 8
        %s577 = scalar_lea.vmem %s1, %s576
        %p578 = scmp.lt.s32.totalorder %s37, 1
        %s579 = scalar_select %p578, %s37, 1
        %s580 = scalar_lea.vmem %s4, %s579
        %v581 = vld [vmem:[%s570] sm:$0xff]
        %v582 = vld [vmem:[%s577] sm:$0xff]
        %v583 = vld [vmem:[%s488] sm:$0xff]
        %v584 = vld [vmem:[%s498] sm:$0xff]
        %v585 = vld [vmem:[%s580] sm:$0x1]
        %v587 = vperm.slane %v585, 0
        %vm589 = vcmask 64512
        %v591 = vsel %vm589, %v582, 0
        %v594 = vsel %vm589, %v583, 0
        %596 = vmatpush.xpose.msra.mxu0 0.0
        %597 = vmatpush.xpose.msra.mxu0 0.0
        %598 = vmatpush.xpose.msra.mxu0 0.0
        %599 = vmatpush.xpose.msra.mxu0 0.0
        %600 = vmatpush.xpose.msra.mxu0 0.0
        %601 = vmatpush.xpose.msra.mxu0 0.0
        %602 = vmatpush.xpose.msra.mxu0 0.0
        %603 = vmatpush.xpose.msra.mxu0 0.0
        %604 = vmatpush.xpose.msra.mxu0 0.0
        %605 = vmatpush.xpose.msra.mxu0 0.0
        %606 = vmatpush.xpose.msra.mxu0 0.0
        %607 = vmatpush.xpose.msra.mxu0 0.0
        %608 = vmatpush.xpose.msra.mxu0 0.0
        %609 = vmatpush.xpose.msra.mxu0 0.0
        %610 = vmatpush.xpose.msra.mxu0 0.0
        %611 = vmatpush.xpose.msra.mxu0 %v594
        %612 = vmatmul.f32.gmra.mxu0 %v591
        %v613 = vpop.f32.mrf.mxu0
        %v614 = vadd.f32 %v587, %v613
        %615 = vdwg.mxu0
        %v616 = vsel %vm589, %v614, -inf
        %617 = vmax.xlane.f32.xlu0 %v616
        %v618 = vpop.xlane.xlu0 %617
        %v619 = vsub.f32 %v614, %v618
        %v620 = vmul.f32 %v619, 1.442695
        %v621 = vpow.pop %v620
        %v622 = vsel %vm589, %v621, 0.0
        %623 = vadd.xlane.f32.xlu0 %v622
        %v624 = vpop.xlane.xlu0 %623
        %v625 = vrcp.pop %v624
        %v627 = vsel %vm589, %v621, 0
        %629 = vmatpush.msra.mxu0 0.0
        %630 = vmatpush.msra.mxu0 0.0
        %631 = vmatpush.msra.mxu0 0.0
        %632 = vmatpush.msra.mxu0 0.0
        %633 = vmatpush.msra.mxu0 0.0
        %634 = vmatpush.msra.mxu0 0.0
        %635 = vmatpush.msra.mxu0 0.0
        %636 = vmatpush.msra.mxu0 0.0
        %637 = vmatpush.msra.mxu0 0.0
        %638 = vmatpush.msra.mxu0 0.0
        %639 = vmatpush.msra.mxu0 0.0
        %640 = vmatpush.msra.mxu0 0.0
        %641 = vmatpush.msra.mxu0 0.0
        %642 = vmatpush.msra.mxu0 0.0
        %643 = vmatpush.msra.mxu0 0.0
        %644 = vmatpush.msra.mxu0 %v584
        %645 = vmatmul.f32.gmra.mxu0 %v627
        %v646 = vpop.f32.mrf.mxu0
        %v647 = vadd.f32 0.0, %v646
        %648 = vdwg.mxu0
        %v649 = vmul.f32 %v647, %v625
        %650 = vst.msk [vmem:[#allocation2] sm:$0xff] %vm589, %v649
        %651 = vrot.lane.b32.xlu0 %v582, 120
        %v652 = vpop.permute.xlu0 %651
        %653 = vrot.lane.b32.xlu0 %v583, 120
        %v654 = vpop.permute.xlu0 %653
        %v655 = vsel %vm589, %v652, 0
        %v657 = vsel %vm589, %v654, 0
        %659 = vmatpush.xpose.msra.mxu0 0.0
        %660 = vmatpush.xpose.msra.mxu0 0.0
        %661 = vmatpush.xpose.msra.mxu0 0.0
        %662 = vmatpush.xpose.msra.mxu0 0.0
        %663 = vmatpush.xpose.msra.mxu0 0.0
        %664 = vmatpush.xpose.msra.mxu0 0.0
        %665 = vmatpush.xpose.msra.mxu0 0.0
        %666 = vmatpush.xpose.msra.mxu0 0.0
        %667 = vmatpush.xpose.msra.mxu0 0.0
        %668 = vmatpush.xpose.msra.mxu0 0.0
        %669 = vmatpush.xpose.msra.mxu0 0.0
        %670 = vmatpush.xpose.msra.mxu0 0.0
        %671 = vmatpush.xpose.msra.mxu0 0.0
        %672 = vmatpush.xpose.msra.mxu0 0.0
        %673 = vmatpush.xpose.msra.mxu0 0.0
        %674 = vmatpush.xpose.msra.mxu0 %v657
        %675 = vmatmul.f32.gmra.mxu0 %v655
        %v676 = vpop.f32.mrf.mxu0
        %v677 = vadd.f32 %v587, %v676
        %678 = vdwg.mxu0
        %v679 = vsel %vm589, %v677, -inf
        %680 = vmax.xlane.f32.xlu0 %v679
        %v681 = vpop.xlane.xlu0 %680
        %v682 = vsub.f32 %v677, %v681
        %v683 = vmul.f32 %v682, 1.442695
        %v684 = vpow.pop %v683
        %v685 = vsel %vm589, %v684, 0.0
        %686 = vadd.xlane.f32.xlu0 %v685
        %v687 = vpop.xlane.xlu0 %686
        %v688 = vrcp.pop %v687
        %690 = vrot.lane.b32.xlu0 %v584, 120
        %v691 = vpop.permute.xlu0 %690
        %v694 = vsel %vm589, %v684, 0
        %696 = vmatpush.msra.mxu0 0.0
        %697 = vmatpush.msra.mxu0 0.0
        %698 = vmatpush.msra.mxu0 0.0
        %699 = vmatpush.msra.mxu0 0.0
        %700 = vmatpush.msra.mxu0 0.0
        %701 = vmatpush.msra.mxu0 0.0
        %702 = vmatpush.msra.mxu0 0.0
        %703 = vmatpush.msra.mxu0 0.0
        %704 = vmatpush.msra.mxu0 0.0
        %705 = vmatpush.msra.mxu0 0.0
        %706 = vmatpush.msra.mxu0 0.0
        %707 = vmatpush.msra.mxu0 0.0
        %708 = vmatpush.msra.mxu0 0.0
        %709 = vmatpush.msra.mxu0 0.0
        %710 = vmatpush.msra.mxu0 0.0
        %711 = vmatpush.msra.mxu0 %v691
        %712 = vmatmul.f32.gmra.mxu0 %v694
        %v713 = vpop.f32.mrf.mxu0
        %v714 = vadd.f32 0.0, %v713
        %715 = vdwg.mxu0
        %v716 = vmul.f32 %v714, %v688
        %718 = vrot.lane.b32.xlu0 %v716, 8
        %v719 = vpop.permute.xlu0 %718
        %vm721 = vcmask 130112
        %722 = vst.msk [vmem:[#allocation2] sm:$0xff] %vm721, %v719
        %723 = vrot.lane.b32.xlu0 %v582, 112
        %v724 = vpop.permute.xlu0 %723
        %725 = vrot.lane.b32.xlu0 %v583, 112
        %v726 = vpop.permute.xlu0 %725
        %v727 = vsel %vm589, %v724, 0
        %v729 = vsel %vm589, %v726, 0
        %731 = vmatpush.xpose.msra.mxu0 0.0
        %732 = vmatpush.xpose.msra.mxu0 0.0
        %733 = vmatpush.xpose.msra.mxu0 0.0
        %734 = vmatpush.xpose.msra.mxu0 0.0
        %735 = vmatpush.xpose.msra.mxu0 0.0
        %736 = vmatpush.xpose.msra.mxu0 0.0
        %737 = vmatpush.xpose.msra.mxu0 0.0
        %738 = vmatpush.xpose.msra.mxu0 0.0
        %739 = vmatpush.xpose.msra.mxu0 0.0
        %740 = vmatpush.xpose.msra.mxu0 0.0
        %741 = vmatpush.xpose.msra.mxu0 0.0
        %742 = vmatpush.xpose.msra.mxu0 0.0
        %743 = vmatpush.xpose.msra.mxu0 0.0
        %744 = vmatpush.xpose.msra.mxu0 0.0
        %745 = vmatpush.xpose.msra.mxu0 0.0
        %746 = vmatpush.xpose.msra.mxu0 %v729
        %747 = vmatmul.f32.gmra.mxu0 %v727
        %v748 = vpop.f32.mrf.mxu0
        %v749 = vadd.f32 %v587, %v748
        %750 = vdwg.mxu0
        %v751 = vsel %vm589, %v749, -inf
        %752 = vmax.xlane.f32.xlu0 %v751
        %v753 = vpop.xlane.xlu0 %752
        %v754 = vsub.f32 %v749, %v753
        %v755 = vmul.f32 %v754, 1.442695
        %v756 = vpow.pop %v755
        %v757 = vsel %vm589, %v756, 0.0
        %758 = vadd.xlane.f32.xlu0 %v757
        %v759 = vpop.xlane.xlu0 %758
        %v760 = vrcp.pop %v759
        %761 = vrot.lane.b32.xlu0 %v584, 112
        %v762 = vpop.permute.xlu0 %761
        %v765 = vsel %vm589, %v756, 0
        %767 = vmatpush.msra.mxu0 0.0
        %768 = vmatpush.msra.mxu0 0.0
        %769 = vmatpush.msra.mxu0 0.0
        %770 = vmatpush.msra.mxu0 0.0
        %771 = vmatpush.msra.mxu0 0.0
        %772 = vmatpush.msra.mxu0 0.0
        %773 = vmatpush.msra.mxu0 0.0
        %774 = vmatpush.msra.mxu0 0.0
        %775 = vmatpush.msra.mxu0 0.0
        %776 = vmatpush.msra.mxu0 0.0
        %777 = vmatpush.msra.mxu0 0.0
        %778 = vmatpush.msra.mxu0 0.0
        %779 = vmatpush.msra.mxu0 0.0
        %780 = vmatpush.msra.mxu0 0.0
        %781 = vmatpush.msra.mxu0 0.0
        %782 = vmatpush.msra.mxu0 %v762
        %783 = vmatmul.f32.gmra.mxu0 %v765
        %v784 = vpop.f32.mrf.mxu0
        %v785 = vadd.f32 0.0, %v784
        %786 = vdwg.mxu0
        %v787 = vmul.f32 %v785, %v760
        %789 = vrot.lane.b32.xlu0 %v787, 16
        %v790 = vpop.permute.xlu0 %789
        %vm792 = vcmask 195712
        %793 = vst.msk [vmem:[#allocation2] sm:$0xff] %vm792, %v790
        %794 = vrot.lane.b32.xlu0 %v582, 104
        %v795 = vpop.permute.xlu0 %794
        %796 = vrot.lane.b32.xlu0 %v583, 104
        %v797 = vpop.permute.xlu0 %796
        %v798 = vsel %vm589, %v795, 0
        %v800 = vsel %vm589, %v797, 0
        %802 = vmatpush.xpose.msra.mxu0 0.0
        %803 = vmatpush.xpose.msra.mxu0 0.0
        %804 = vmatpush.xpose.msra.mxu0 0.0
        %805 = vmatpush.xpose.msra.mxu0 0.0
        %806 = vmatpush.xpose.msra.mxu0 0.0
        %807 = vmatpush.xpose.msra.mxu0 0.0
        %808 = vmatpush.xpose.msra.mxu0 0.0
        %809 = vmatpush.xpose.msra.mxu0 0.0
        %810 = vmatpush.xpose.msra.mxu0 0.0
        %811 = vmatpush.xpose.msra.mxu0 0.0
        %812 = vmatpush.xpose.msra.mxu0 0.0
        %813 = vmatpush.xpose.msra.mxu0 0.0
        %814 = vmatpush.xpose.msra.mxu0 0.0
        %815 = vmatpush.xpose.msra.mxu0 0.0
        %816 = vmatpush.xpose.msra.mxu0 0.0
        %817 = vmatpush.xpose.msra.mxu0 %v800
        %818 = vmatmul.f32.gmra.mxu0 %v798
        %v819 = vpop.f32.mrf.mxu0
        %v820 = vadd.f32 %v587, %v819
        %821 = vdwg.mxu0
        %v822 = vsel %vm589, %v820, -inf
        %823 = vmax.xlane.f32.xlu0 %v822
        %v824 = vpop.xlane.xlu0 %823
        %v825 = vsub.f32 %v820, %v824
        %v826 = vmul.f32 %v825, 1.442695
        %v827 = vpow.pop %v826
        %v828 = vsel %vm589, %v827, 0.0
        %829 = vadd.xlane.f32.xlu0 %v828
        %v830 = vpop.xlane.xlu0 %829
        %v831 = vrcp.pop %v830
        %832 = vrot.lane.b32.xlu0 %v584, 104
        %v833 = vpop.permute.xlu0 %832
        %v836 = vsel %vm589, %v827, 0
        %838 = vmatpush.msra.mxu0 0.0
        %839 = vmatpush.msra.mxu0 0.0
        %840 = vmatpush.msra.mxu0 0.0
        %841 = vmatpush.msra.mxu0 0.0
        %842 = vmatpush.msra.mxu0 0.0
        %843 = vmatpush.msra.mxu0 0.0
        %844 = vmatpush.msra.mxu0 0.0
        %845 = vmatpush.msra.mxu0 0.0
        %846 = vmatpush.msra.mxu0 0.0
        %847 = vmatpush.msra.mxu0 0.0
        %848 = vmatpush.msra.mxu0 0.0
        %849 = vmatpush.msra.mxu0 0.0
        %850 = vmatpush.msra.mxu0 0.0
        %851 = vmatpush.msra.mxu0 0.0
        %852 = vmatpush.msra.mxu0 0.0
        %853 = vmatpush.msra.mxu0 %v833
        %854 = vmatmul.f32.gmra.mxu0 %v836
        %v855 = vpop.f32.mrf.mxu0
        %v856 = vadd.f32 0.0, %v855
        %857 = vdwg.mxu0
        %v858 = vmul.f32 %v856, %v831
        %860 = vrot.lane.b32.xlu0 %v858, 24
        %v861 = vpop.permute.xlu0 %860
        %vm863 = vcmask 261312
        %864 = vst.msk [vmem:[#allocation2] sm:$0xff] %vm863, %v861
        %v865 = vld [vmem:[#allocation2] sm:$0xff]
        %v866 = vld [vmem:[%s5] sm:$0xff]
        %v867 = vld [vmem:[%s5 + $0x8] sm:$0xff]
        %v868 = vld [vmem:[%s5 + $0x10] sm:$0xff]
        %v869 = vld [vmem:[%s5 + $0x18] sm:$0xff]
        %v870 = vld [vmem:[%s6] sm:$0x1]
        %v872 = vperm.slane %v870, 0
        %vm874 = vcmask 261120
        %v876 = vsel %vm874, %v865, 0
        %878 = vmatpush.msra.mxu0 0.0
        %879 = vmatpush.msra.mxu0 0.0
        %880 = vmatpush.msra.mxu0 0.0
        %881 = vmatpush.msra.mxu0 0.0
        %882 = vmatpush.msra.mxu0 0.0
        %883 = vmatpush.msra.mxu0 0.0
        %884 = vmatpush.msra.mxu0 0.0
        %885 = vmatpush.msra.mxu0 0.0
        %886 = vmatpush.msra.mxu0 0.0
        %887 = vmatpush.msra.mxu0 0.0
        %888 = vmatpush.msra.mxu0 0.0
        %889 = vmatpush.msra.mxu0 0.0
        %890 = vmatpush.msra.mxu0 %v869
        %891 = vmatpush.msra.mxu0 %v868
        %892 = vmatpush.msra.mxu0 %v867
        %893 = vmatpush.msra.mxu0 %v866
        %894 = vmatmul.f32.gmra.mxu0 %v876
        %v895 = vpop.f32.mrf.mxu0
        %v896 = vadd.f32 %v872, %v895
        %897 = vdwg.mxu0
        %v898 = vadd.f32 %v581, %v896
        %v899 = vsel %vm874, %v898, 0.0
        %900 = vadd.xlane.f32.xlu0 %v899
        %v901 = vpop.xlane.xlu0 %900
        %v902 = vrcp.pop 32.0
        %v903 = vmul.f32 32.0, %v902
        %v904 = vsub.f32 1.0, %v903
        %v905 = vmul.f32 %v902, %v904
        %v906 = vadd.f32 %v902, %v905
        %vm907 = vweird.f32 %v902
        %v908 = vsel %vm907, %v902, %v906
        %v909 = vmul.f32 %v901, %v908
        %v910 = vsub.f32 %v898, %v909
        %v911 = vmul.f32 %v910, %v910
        %v912 = vsel %vm874, %v911, 0.0
        %913 = vadd.xlane.f32.xlu0 %v912
        %v914 = vpop.xlane.xlu0 %913
        %v915 = vmul.f32 %v914, %v908
        %v916 = vadd.f32 %v915, 1e-06
        %v917 = vrsqrt.pop %v916
        %v918 = vmul.f32 %v917, %v916
        %v919 = vmul.f32 %v918, %v917
        %v920 = vmul.f32 0.5, %v919
        %v921 = vsub.f32 1.5, %v920
        %v922 = vmul.f32 %v917, %v921
        %vm923 = vweird.f32 %v916
        %vm924 = vweird.f32 %v917
        %vm925 = vmor %vm923, %vm924
        %v926 = vsel %vm925, %v917, %v922
        %v927 = vmul.f32 %v910, %v926
        %v928 = vld [vmem:[%s7] sm:$0x1]
        %v930 = vperm.slane %v928, 0
        %v932 = vmul.f32 %v927, %v930
        %v933 = vld [vmem:[%s8] sm:$0x1]
        %v935 = vperm.slane %v933, 0
        %v937 = vadd.f32 %v932, %v935
        %v938 = vld [vmem:[%s9] sm:$0xff]
        %v939 = vld [vmem:[%s9 + $0x8] sm:$0xff]
        %v940 = vld [vmem:[%s9 + $0x10] sm:$0xff]
        %v941 = vld [vmem:[%s9 + $0x18] sm:$0xff]
        %v942 = vld [vmem:[%s10] sm:$0x1]
        %v944 = vperm.slane %v942, 0
        %v947 = vsel %vm874, %v937, 0
        %949 = vmatpush.msra.mxu0 0.0
        %950 = vmatpush.msra.mxu0 0.0
        %951 = vmatpush.msra.mxu0 0.0
        %952 = vmatpush.msra.mxu0 0.0
        %953 = vmatpush.msra.mxu0 0.0
        %954 = vmatpush.msra.mxu0 0.0
        %955 = vmatpush.msra.mxu0 0.0
        %956 = vmatpush.msra.mxu0 0.0
        %957 = vmatpush.msra.mxu0 0.0
        %958 = vmatpush.msra.mxu0 0.0
        %959 = vmatpush.msra.mxu0 0.0
        %960 = vmatpush.msra.mxu0 0.0
        %961 = vmatpush.msra.mxu0 %v941
        %962 = vmatpush.msra.mxu0 %v940
        %963 = vmatpush.msra.mxu0 %v939
        %964 = vmatpush.msra.mxu0 %v938
        %965 = vmatmul.f32.gmra.mxu0 %v947
        %v966 = vpop.f32.mrf.mxu0
        %v967 = vadd.f32 %v944, %v966
        %968 = vdwg.mxu0
        %v969 = vmax.f32 %v967, 0.0
        %v970 = vld [vmem:[%s11] sm:$0xff]
        %v971 = vld [vmem:[%s11 + $0x8] sm:$0xff]
        %v972 = vld [vmem:[%s11 + $0x10] sm:$0xff]
        %v973 = vld [vmem:[%s11 + $0x18] sm:$0xff]
        %v974 = vld [vmem:[%s11 + $0x20] sm:$0xff]
        %v975 = vld [vmem:[%s11 + $0x28] sm:$0xff]
        %v976 = vld [vmem:[%s11 + $0x30] sm:$0xff]
        %v977 = vld [vmem:[%s11 + $0x38] sm:$0xff]
        %v978 = vld [vmem:[%s12] sm:$0x1]
        %v980 = vperm.slane %v978, 0
        %vm982 = vcmask 523264
        %v984 = vsel %vm982, %v969, 0
        %986 = vmatpush.msra.mxu0 0.0
        %987 = vmatpush.msra.mxu0 0.0
        %988 = vmatpush.msra.mxu0 0.0
        %989 = vmatpush.msra.mxu0 0.0
        %990 = vmatpush.msra.mxu0 0.0
        %991 = vmatpush.msra.mxu0 0.0
        %992 = vmatpush.msra.mxu0 0.0
        %993 = vmatpush.msra.mxu0 0.0
        %994 = vmatpush.msra.mxu0 %v977
        %995 = vmatpush.msra.mxu0 %v976
        %996 = vmatpush.msra.mxu0 %v975
        %997 = vmatpush.msra.mxu0 %v974
        %998 = vmatpush.msra.mxu0 %v973
        %999 = vmatpush.msra.mxu0 %v972
        %1000 = vmatpush.msra.mxu0 %v971
        %1001 = vmatpush.msra.mxu0 %v970
        %1002 = vmatmul.f32.gmra.mxu0 %v984
        %v1003 = vpop.f32.mrf.mxu0
        %v1004 = vadd.f32 %v980, %v1003
        %1005 = vdwg.mxu0
        %v1006 = vadd.f32 %v898, %v1004
        %1007 = vst.msk [vmem:[%s563] sm:$0xff] %vm874, %v1006
        %s1008 = sand.u32 %s357, 1
        %s1009 = scalar_lea.sflag [#allocation5], %s1008
        %s1010 = sand.u32 %s357, 1
        %s1011 = smul.addr %s1010, 8
        %s1012 = scalar_lea.vmem [#allocation8], %s1011
        // Predicated region
        $region81: #{tpu_custom_call.1} parent=71 // pred_check
          %p1013 = pneg %p367
        $region82: #{tpu_custom_call.1} parent=71 // pred_check_branch
          %1015 = sbr.rel (%p1013) target = $region84
        $region83: #{tpu_custom_call.1} parent=71 // pred_region
          %1017 = vsyncadd %s1009, 0
          %s1018 = sadd.s32 %s38, %s37
          %s1019 = smul.addr %s1018, 8
          %s1020 = scalar_lea.hbm %s13, %s1019
          %s1022 = sshll.u32 %s1012, 4
          %s1023 = int_to_ptr.vmem [resolvable:$true] %s1022
          %s1024 = sshll.u32 %s1020, 4
          %s1025 = int_to_ptr.hbm [resolvable:$true] %s1024
          %1027 = dma.vmem_to_hbm [thread:$0]  %s1023, 128, %s1025, %s1009
        $region84: #{tpu_custom_call.1} parent=71 // pred_fallthru
          _
      $region72: #{tpu_custom_call.1} parent=5 // pred_fallthru
        _
      %p1028 = scmp.le.s32.totalorder 2, %s28
      // Predicated region
      $region85: #{tpu_custom_call.1} parent=5 // pred_check
        %p1029 = pneg %p1028
      $region86: #{tpu_custom_call.1} parent=5 // pred_check_branch
        %1031 = sbr.rel (%p1029) target = $region88
      $region87: #{tpu_custom_call.1} parent=5 // pred_region
        %s1032 = ssub.s32 %s28, 2
        // Predicated region
        $region89: #{tpu_custom_call.1} parent=87 // pred_check
          %p1033 = pneg %p373
        $region90: #{tpu_custom_call.1} parent=87 // pred_check_branch
          %1035 = sbr.rel (%p1033) target = $region92
        $region91: #{tpu_custom_call.1} parent=87 // pred_region
          %s1036 = sand.u32 %s358, 1
          %s1037 = scalar_lea.sflag [#allocation5], %s1036
          %s1038 = sand.u32 %s358, 1
          %s1039 = smul.addr %s1038, 8
          %s1040 = scalar_lea.vmem [#allocation8], %s1039
          %1042 = dma.done %s1037, 128
        $region92: #{tpu_custom_call.1} parent=87 // pred_fallthru
          _
      $region88: #{tpu_custom_call.1} parent=5 // pred_fallthru
        _
    $region6: #{tpu_custom_call.1} parent=1 // loop_footer
      %s32 = sadd.s32 1, %s28
    $region7: #{tpu_custom_call.1} parent=1 // loop_footer_branch
      %27 = sbr.rel target = $region3
    $region8: #{tpu_custom_call.1} parent=1 // loop_exit
      _
    %1043 = vsyncpa [#allocation4], 1
    %s1044 = scalar_lea.sflag [#allocation4], 1
    %1045 = vsyncpa %s1044, 1
    %1046 = vsyncpa [#allocation7], 1
    %s1047 = scalar_lea.sflag [#allocation7], 1
    %1048 = vsyncpa %s1047, 1
    %1049 = vsyncpa [#allocation5], 1
    %s1050 = scalar_lea.sflag [#allocation5], 1
    %1051 = vsyncpa %s1050, 1

</llo_original>
